<compile_context>
chip_gen: v7x
topology: tpu7x:2x2x1
jax: 0.10.0
libtpu: 0.0.40
codegen_flags: <defaults>
</compile_context>

<pallas_src>
import functools

import jax
import jax.numpy as jnp
from jax import lax
from jax.experimental import pallas as pl
from jax.experimental.pallas import tpu as pltpu


def _qkv_attn_kernel(sqk_ref, q_ref, k_ref, v_ref, o_ref, *,
                     logit_scale, l2_attention, mask_self, mask_fill,
                     tq, t_valid):
    # sqk_ref: (1, 1, T) f32 | q_ref: (1, 1, tq, C) | k_ref/v_ref: (1, 1, T, C)
    # o_ref: (1, tq, C)
    q = q_ref[0, 0]                               # (tq, C), narrow io dtype
    k = k_ref[0, 0]                               # (T,  C)

    # q @ k^T: contract the last axes directly (no materialized transpose),
    # bf16 operands with f32 accumulation on the MXU.
    qk = lax.dot_general(q, k, (((1,), (1,)), ((), ())),
                         preferred_element_type=jnp.float32)   # (tq, T) f32

    if l2_attention:
        qf = q.astype(jnp.float32)
        sq_q = jnp.sum(qf * qf, axis=-1, keepdims=True)        # (tq, 1)
        sq_k = sqk_ref[0]                                      # (1, T)  (hoisted)
        d2 = jnp.maximum(sq_q + sq_k - 2.0 * qk, 0.0)
        # scale folded: ||s*q - s*k|| == s * ||q - k||
        logits = (-logit_scale) * jnp.sqrt(d2)
        if mask_self:
            t = k.shape[0]
            row = (lax.broadcasted_iota(jnp.int32, (tq, t), 0)
                   + pl.program_id(1) * tq)
            col = lax.broadcasted_iota(jnp.int32, (tq, t), 1)
            logits = jnp.where(row == col, mask_fill, logits)
    else:
        logits = qk if logit_scale == 1.0 else qk * logit_scale

    if t_valid is not None:
        # Mask key columns that only exist because of T padding.
        col = lax.broadcasted_iota(jnp.int32, logits.shape, 1)
        logits = jnp.where(col < t_valid, logits, -1e30)

    # softmax along the key axis (f32 math, EUP reciprocal)
    m = jnp.max(logits, axis=-1, keepdims=True)
    p = jnp.exp(logits - m)
    denom = jnp.sum(p, axis=-1, keepdims=True)
    attn = (p * pl.reciprocal(denom, approx=True)).astype(v_ref.dtype)

    o_ref[0] = jnp.dot(attn, v_ref[0, 0],
                       preferred_element_type=jnp.float32).astype(o_ref.dtype)


def qkv_attention(qkv, *, n_heads=1, scale=1.0, l2_attention=True,
                  scale_in=True, mask_self=False, mask_value=float("-inf"),
                  tq=256):
    """qkv: [B, T, 3*C].  Returns [B, T, C] with the same dtype as qkv."""
    del n_heads  # config only; does not change the computation here
    B, T, C3 = qkv.shape
    assert C3 % 3 == 0
    C = C3 // 3
    in_dtype = qkv.dtype

    # TODO(synk): TPU has no native fp16 compute; kernel I/O uses bf16 and the
    # softmax / accumulation run in f32, result is cast back to fp16 outside.
    io_dtype = jnp.bfloat16 if in_dtype == jnp.float16 else in_dtype
    itemsize = jnp.dtype(io_dtype).itemsize

    # Query-tile size and (optional) padding of T to a multiple of it.
    tq_eff = max(8, min(int(tq), T))
    tq_eff = ((tq_eff + 7) // 8) * 8
    Tp = ((T + tq_eff - 1) // tq_eff) * tq_eff
    t_valid = T if Tp != T else None

    x = qkv if in_dtype == io_dtype else qkv.astype(io_dtype)
    if Tp != T:
        x = jnp.pad(x, ((0, 0), (0, Tp - T), (0, 0)))
    # One layout pass: [B, Tp, 3C] -> [3, B, Tp, C]; q/k/v are then selected
    # purely by BlockSpec index_maps (no per-tensor split copies, no up-cast).
    x3 = x.reshape(B, Tp, 3, C).transpose(2, 0, 1, 3)

    # Hoist the K squared-norms: computed once per call (not per query tile),
    # on *unscaled* k (scale is folded into the logits). Lane-dense (T last).
    sq_k = jnp.sum(jnp.square(x3[1].astype(jnp.float32)), axis=-1)
    sq_k = sq_k.reshape(B, 1, Tp)

    scale = float(scale)
    if l2_attention:
        logit_scale = scale                     # -cdist(s*q, s*k) == -s*cdist(q, k)
        mask_fill = float(mask_value) if scale_in else float(mask_value) * scale
    else:
        logit_scale = scale * scale if scale_in else scale
        mask_fill = float(mask_value)

    kernel = functools.partial(
        _qkv_attn_kernel,
        logit_scale=logit_scale,
        l2_attention=l2_attention,
        mask_self=mask_self,
        mask_fill=mask_fill,
        tq=tq_eff,
        t_valid=t_valid,
    )

    grid = (B, Tp // tq_eff)

    # VMEM budget: double-buffered q/o tiles + full K/V blocks + logits work.
    est = (2 * (2 * tq_eff * C + 2 * Tp * C) * itemsize
           + 2 * Tp * 4 + 3 * tq_eff * Tp * 4 + (4 << 20))
    cp_kwargs = dict(dimension_semantics=("parallel", "parallel"))
    if est > (16 << 20):  # above v5e's default scoped-VMEM limit
        cp_kwargs["vmem_limit_bytes"] = int(min(est, 100 << 20))

    out = pl.pallas_call(
        kernel,
        out_shape=jax.ShapeDtypeStruct((B, Tp, C), io_dtype),
        grid_spec=pltpu.PrefetchScalarGridSpec(
            num_scalar_prefetch=0,
            grid=grid,
            in_specs=[
                pl.BlockSpec((1, 1, Tp), lambda b, i: (b, 0, 0)),            # sq_k
                pl.BlockSpec((1, 1, tq_eff, C), lambda b, i: (0, b, i, 0)),  # q tile
                pl.BlockSpec((1, 1, Tp, C), lambda b, i: (1, b, 0, 0)),      # full K
                pl.BlockSpec((1, 1, Tp, C), lambda b, i: (2, b, 0, 0)),      # full V
            ],
            out_specs=pl.BlockSpec((1, tq_eff, C), lambda b, i: (b, i, 0)),
        ),
        compiler_params=pltpu.CompilerParams(**cp_kwargs),
    )(sq_k, x3, x3, x3)

    if Tp != T:
        out = out[:, :T]
    if out.dtype != in_dtype:
        out = out.astype(in_dtype)
    return out


if __name__ == "__main__":
    # Small shapes consistent with the module: batch=2, seq=256, heads=1, dim=32
    B, T, H, D = 2, 256, 1, 32
    C = H * D
    scale = 1.0 * D ** (-0.5)

    key = jax.random.PRNGKey(0)
    kq, kk, kv = jax.random.split(key, 3)
    q = jax.random.normal(kq, (B, T, C), dtype=jnp.float32).astype(jnp.float16)
    k = jax.random.normal(kk, (B, T, C), dtype=jnp.float32).astype(jnp.float16)
    v = jax.random.normal(kv, (B, T, C), dtype=jnp.float32).astype(jnp.float16)
    qkv = jnp.concatenate([q, k, v], axis=2)  # [B, T, 3*C], fp16 like torch test

    out = qkv_attention(qkv, n_heads=H, scale=scale)
    out = jax.block_until_ready(out)
    assert out.shape == (B, T, C), out.shape
    assert out.dtype == qkv.dtype, out.dtype

    # Pure-JAX reference (f32) for a sanity check.
    qf, kf, vf = (q.astype(jnp.float32), k.astype(jnp.float32),
                  v.astype(jnp.float32))
    qs, ks = qf * scale, kf * scale
    dist = jnp.sqrt(jnp.maximum(
        jnp.sum(qs * qs, -1)[:, :, None] + jnp.sum(ks * ks, -1)[:, None, :]
        - 2.0 * jnp.einsum("btc,bsc->bts", qs, ks), 0.0))
    ref = jnp.einsum("bts,bsc->btc", jax.nn.softmax(-dist, axis=-1), vf)
    assert jnp.allclose(out.astype(jnp.float32), ref, atol=3e-2, rtol=3e-2)

    # Also exercise the multi-query-tile path.
    out2 = jax.block_until_ready(
        qkv_attention(qkv, n_heads=H, scale=scale, tq=128))
    assert jnp.allclose(out2.astype(jnp.float32), ref, atol=3e-2, rtol=3e-2)

    print("KERNEL_OK")
</pallas_src>

<mosaic_0001>
module attributes {stable_mosaic.version = 11 : i64} {
  func.func @_qkv_attn_kernel(%arg0: i32, %arg1: i32, %arg2: memref<1x1x256xf32, #tpu.memory_space<vmem>>, %arg3: memref<1x1x256x32xbf16, #tpu.memory_space<vmem>>, %arg4: memref<1x1x256x32xbf16, #tpu.memory_space<vmem>>, %arg5: memref<1x1x256x32xbf16, #tpu.memory_space<vmem>>, %arg6: memref<1x256x32xbf16, #tpu.memory_space<vmem>>) attributes {dimension_semantics = [#tpu.dimension_semantics<parallel>, #tpu.dimension_semantics<parallel>], iteration_bounds = array<i64: 2, 1>, scalar_prefetch = 0 : i64, scratch_operands = 0 : i64, tpu.core_type = #tpu.core_type<tc>, window_params = [{transform_indices = @transform_0, window_bounds = array<i64: 1, 1, 256>}, {transform_indices = @transform_1, window_bounds = array<i64: 1, 1, 256, 32>}, {transform_indices = @transform_2, window_bounds = array<i64: 1, 1, 256, 32>}, {transform_indices = @transform_3, window_bounds = array<i64: 1, 1, 256, 32>}, {transform_indices = @transform_4, window_bounds = array<i64: 1, 256, 32>}]} {
    %c0 = arith.constant 0 : index
    %c0_0 = arith.constant 0 : index
    %c0_1 = arith.constant 0 : index
    %c0_2 = arith.constant 0 : index
    %0 = vector.load %arg3[%c0, %c0_0, %c0_1, %c0_2] : memref<1x1x256x32xbf16, #tpu.memory_space<vmem>>, vector<1x1x256x32xbf16>
    %1 = vector.shape_cast %0 : vector<1x1x256x32xbf16> to vector<256x32xbf16>
    %c0_3 = arith.constant 0 : index
    %c0_4 = arith.constant 0 : index
    %c0_5 = arith.constant 0 : index
    %c0_6 = arith.constant 0 : index
    %2 = vector.load %arg4[%c0_3, %c0_4, %c0_5, %c0_6] : memref<1x1x256x32xbf16, #tpu.memory_space<vmem>>, vector<1x1x256x32xbf16>
    %3 = vector.shape_cast %2 : vector<1x1x256x32xbf16> to vector<256x32xbf16>
    %cst = arith.constant dense<0.000000e+00> : vector<256x256xf32>
    %4 = tpu.matmul %1, %3, %cst {dimension_numbers = #tpu.dot_dimension_numbers<[1], [1], [0], [0], [0, 0, 1, 0], [], []>} : vector<256x32xbf16>, vector<256x32xbf16>, vector<256x256xf32> -> vector<256x256xf32>
    %5 = arith.extf %1 : vector<256x32xbf16> to vector<256x32xf32>
    %6 = arith.mulf %5, %5 : vector<256x32xf32>
    %cst_7 = arith.constant dense<0.000000e+00> : vector<256xf32>
    %7 = vector.multi_reduction <add>, %6, %cst_7 [1] : vector<256x32xf32> to vector<256xf32>
    %8 = vector.shape_cast %7 : vector<256xf32> to vector<256x1xf32>
    %c0_8 = arith.constant 0 : index
    %c0_9 = arith.constant 0 : index
    %c0_10 = arith.constant 0 : index
    %9 = vector.load %arg2[%c0_8, %c0_9, %c0_10] : memref<1x1x256xf32, #tpu.memory_space<vmem>>, vector<1x1x256xf32>
    %10 = vector.shape_cast %9 : vector<1x1x256xf32> to vector<1x256xf32>
    %11 = vector.broadcast %8 : vector<256x1xf32> to vector<256x256xf32>
    %12 = vector.broadcast %10 : vector<1x256xf32> to vector<256x256xf32>
    %13 = arith.addf %11, %12 : vector<256x256xf32>
    %cst_11 = arith.constant 2.000000e+00 : f32
    %14 = vector.broadcast %cst_11 : f32 to vector<256x256xf32>
    %15 = arith.mulf %14, %4 : vector<256x256xf32>
    %16 = arith.subf %13, %15 : vector<256x256xf32>
    %cst_12 = arith.constant 0.000000e+00 : f32
    %17 = vector.broadcast %cst_12 : f32 to vector<256x256xf32>
    %18 = arith.maximumf %16, %17 : vector<256x256xf32>
    %19 = math.sqrt %18 : vector<256x256xf32>
    %cst_13 = arith.constant -0.176776692 : f32
    %20 = vector.broadcast %cst_13 : f32 to vector<256x256xf32>
    %21 = arith.mulf %20, %19 : vector<256x256xf32>
    %cst_14 = arith.constant dense<0xFF800000> : vector<256xf32>
    %22 = vector.multi_reduction <maximumf>, %21, %cst_14 [1] : vector<256x256xf32> to vector<256xf32>
    %23 = vector.shape_cast %22 : vector<256xf32> to vector<256x1xf32>
    %24 = vector.broadcast %23 : vector<256x1xf32> to vector<256x256xf32>
    %25 = arith.subf %21, %24 : vector<256x256xf32>
    %26 = math.exp %25 : vector<256x256xf32>
    %cst_15 = arith.constant dense<0.000000e+00> : vector<256xf32>
    %27 = vector.multi_reduction <add>, %26, %cst_15 [1] : vector<256x256xf32> to vector<256xf32>
    %28 = vector.shape_cast %27 : vector<256xf32> to vector<256x1xf32>
    %29 = tpu.reciprocal %28 {approx = true} : vector<256x1xf32> -> vector<256x1xf32>
    %30 = vector.broadcast %29 : vector<256x1xf32> to vector<256x256xf32>
    %31 = arith.mulf %26, %30 : vector<256x256xf32>
    %32 = arith.truncf %31 : vector<256x256xf32> to vector<256x256xbf16>
    %c0_16 = arith.constant 0 : index
    %c0_17 = arith.constant 0 : index
    %c0_18 = arith.constant 0 : index
    %c0_19 = arith.constant 0 : index
    %33 = vector.load %arg5[%c0_16, %c0_17, %c0_18, %c0_19] : memref<1x1x256x32xbf16, #tpu.memory_space<vmem>>, vector<1x1x256x32xbf16>
    %34 = vector.shape_cast %33 : vector<1x1x256x32xbf16> to vector<256x32xbf16>
    %cst_20 = arith.constant dense<0.000000e+00> : vector<256x32xf32>
    %35 = tpu.matmul %32, %34, %cst_20 {dimension_numbers = #tpu.dot_dimension_numbers<[1], [0], [0], [1], [0, 0, 1, 1], [], []>} : vector<256x256xbf16>, vector<256x32xbf16>, vector<256x32xf32> -> vector<256x32xf32>
    %36 = arith.truncf %35 : vector<256x32xf32> to vector<256x32xbf16>
    %c0_21 = arith.constant 0 : index
    %c0_22 = arith.constant 0 : index
    %c0_23 = arith.constant 0 : index
    %37 = vector.load %arg6[%c0_21, %c0_22, %c0_23] : memref<1x256x32xbf16, #tpu.memory_space<vmem>>, vector<1x256x32xbf16>
    %38 = vector.shape_cast %37 : vector<1x256x32xbf16> to vector<256x32xbf16>
    %39 = vector.shape_cast %36 : vector<256x32xbf16> to vector<1x256x32xbf16>
    tpu.vector_store %arg6[%c0_21, %c0_22, %c0_23], %39 {strides = array<i32>} : memref<1x256x32xbf16, #tpu.memory_space<vmem>>, vector<1x256x32xbf16>,
    return
  }
  func.func @transform_0(%arg0: i32, %arg1: i32) -> (i32, i32, i32) {
    %c0_i32 = arith.constant 0 : i32
    %c0_i32_0 = arith.constant 0 : i32
    %c0_i32_1 = arith.constant 0 : i32
    return %arg0, %c0_i32, %c0_i32_0 : i32, i32, i32
  }
  func.func @transform_1(%arg0: i32, %arg1: i32) -> (i32, i32, i32, i32) {
    %c0_i32 = arith.constant 0 : i32
    %c0_i32_0 = arith.constant 0 : i32
    %c0_i32_1 = arith.constant 0 : i32
    return %c0_i32, %arg0, %arg1, %c0_i32_0 : i32, i32, i32, i32
  }
  func.func @transform_2(%arg0: i32, %arg1: i32) -> (i32, i32, i32, i32) {
    %c1_i32 = arith.constant 1 : i32
    %c0_i32 = arith.constant 0 : i32
    %c0_i32_0 = arith.constant 0 : i32
    %c0_i32_1 = arith.constant 0 : i32
    return %c1_i32, %arg0, %c0_i32, %c0_i32_0 : i32, i32, i32, i32
  }
  func.func @transform_3(%arg0: i32, %arg1: i32) -> (i32, i32, i32, i32) {
    %c2_i32 = arith.constant 2 : i32
    %c0_i32 = arith.constant 0 : i32
    %c0_i32_0 = arith.constant 0 : i32
    %c0_i32_1 = arith.constant 0 : i32
    return %c2_i32, %arg0, %c0_i32, %c0_i32_0 : i32, i32, i32, i32
  }
  func.func @transform_4(%arg0: i32, %arg1: i32) -> (i32, i32, i32) {
    %c0_i32 = arith.constant 0 : i32
    %c0_i32_0 = arith.constant 0 : i32
    return %arg0, %arg1, %c0_i32 : i32, i32, i32
  }
}

</mosaic_0001>

<llo_original>
// kernel: tpu_custom_call.1
$region0: #{tpu_custom_call.1}
  #allocation0 [shape = 'u32[]', space=smem, size = 0x4, offset = 0x4, fixed_abs, tag = 'smem constant byte address 0x4 - core index']
  #allocation1 [shape = 'u32[144,128]{1,0:T(1,128)}', space=vmem, size = 0x12000, scoped, tag = 'internal scratch']
  %s0 = inlined_call_operand.vmem [shape: f32[2,1,256], index: 0, kind: input, shape index: {}]
  %s1 = inlined_call_operand.vmem [shape: bf16[3,2,256,32], index: 1, kind: input, shape index: {}]
  %s2 = inlined_call_operand.vmem [shape: bf16[3,2,256,32], index: 2, kind: input, shape index: {}]
  %s3 = inlined_call_operand.vmem [shape: bf16[3,2,256,32], index: 3, kind: input, shape index: {}]
  %s4 = inlined_call_operand.vmem [shape: bf16[2,256,32], index: 4, kind: output, shape index: {}]
  %s5 = sld [smem:[#allocation0]]
  $region49: #{tpu_custom_call.1} parent=0
    _
  %s7 = ssub.s32 1, %s5
  %s8 = scalar_select 0, %s7, %s5
  loop: start=0, step=1, limit=4
  $region2: #{tpu_custom_call.1} parent=0 // loop_pre_header
    _
  $region3: #{tpu_custom_call.1} parent=0 // loop_header
    %s10 = sphi 0, %s14
    %p11 = scmp.ge.s32.totalorder %s10, 4
    %s17 = sphi 0, %s29
    %s18 = sphi 0, %s25
    %s19 = sphi 0, %s17
    %s20 = sphi 0, %s18
    %s21 = sphi 0, %s19
    %s22 = sphi 0, %s20
    %s32 = sphi 0, %s34
    %s35 = sphi 0, %s32
    %s36 = sphi 0, %s35
    %s52 = sphi 0, %s36
    %s60 = sphi 0, %s62
    %s63 = sphi 0, %s60
    %s64 = sphi 0, %s63
    %s80 = sphi 0, %s64
    %s86 = sphi 0, %s88
    %s89 = sphi 0, %s86
    %s90 = sphi 0, %s89
    %s106 = sphi 0, %s90
    %s112 = sphi 0, %s114
    %s115 = sphi 0, %s112
    %s116 = sphi 0, %s115
    %s132 = sphi 0, %s116
    %s140 = sphi 0, %s142
    %s143 = sphi 0, %s140
    %s144 = sphi 0, %s143
    %s160 = sphi 0, %s144
  $region4: #{tpu_custom_call.1} parent=0 // loop_header_branch
    %13 = sbr.rel (%p11) target = $region8
  $region5: #{tpu_custom_call.1} parent=0 // loop_body
    %s15 = ssub.s32 %s10, 1
    %s16 = ssub.s32 %s10, 2
    %s23 = sadd.s32 1, %s18
    %p24 = scmp.ge.s32.totalorder %s23, 1
    %s25 = scalar_select %p24, 0, %s23
    %s26 = sadd.s32 1, %s17
    %s27 = scalar_select %p24, %s26, %s17
    %p28 = scmp.ge.s32.totalorder %s27, 2
    %s29 = scalar_select %p28, 0, %s27
    %s30 = ssub.s32 %s17, %s29
    %p31 = scmp.eq.s32.totalorder %s30, 0
    %s33 = sadd.s32 %s32, 1
    %s34 = scalar_select %p31, %s32, %s33
    %p37 = pneg %p31
    %p38 = scmp.eq.s32.totalorder %s10, 1
    %p39 = por %p37, %p38
    %p40 = scmp.ne.s32.totalorder %s32, %s35
    %p41 = scmp.eq.s32.totalorder %s10, 0
    %p42 = por %p40, %p41
    %p43 = scmp.ne.s32.totalorder %s32, %s35
    %p44 = scmp.eq.s32.totalorder %s15, 1
    %p45 = por %p43, %p44
    %p46 = scmp.ne.s32.totalorder %s35, %s36
    %p47 = scmp.eq.s32.totalorder %s15, 0
    %p48 = por %p46, %p47
    %p49 = scmp.ne.s32.totalorder %s35, %s36
    %p50 = scmp.eq.s32.totalorder %s16, 1
    %p51 = por %p49, %p50
    %p53 = scmp.ne.s32.totalorder %s36, %s52
    %p54 = scmp.eq.s32.totalorder %s16, 0
    %p55 = por %p53, %p54
    %s56 = ssub.s32 %s17, %s29
    %s57 = ssub.s32 %s18, %s25
    %s58 = sor.u32 %s56, %s57
    %p59 = scmp.eq.s32.totalorder %s58, 0
    %s61 = sadd.s32 %s60, 1
    %s62 = scalar_select %p59, %s60, %s61
    %p65 = pneg %p59
    %p66 = scmp.eq.s32.totalorder %s10, 1
    %p67 = por %p65, %p66
    %p68 = scmp.ne.s32.totalorder %s60, %s63
    %p69 = scmp.eq.s32.totalorder %s10, 0
    %p70 = por %p68, %p69
    %p71 = scmp.ne.s32.totalorder %s60, %s63
    %p72 = scmp.eq.s32.totalorder %s15, 1
    %p73 = por %p71, %p72
    %p74 = scmp.ne.s32.totalorder %s63, %s64
    %p75 = scmp.eq.s32.totalorder %s15, 0
    %p76 = por %p74, %p75
    %p77 = scmp.ne.s32.totalorder %s63, %s64
    %p78 = scmp.eq.s32.totalorder %s16, 1
    %p79 = por %p77, %p78
    %p81 = scmp.ne.s32.totalorder %s64, %s80
    %p82 = scmp.eq.s32.totalorder %s16, 0
    %p83 = por %p81, %p82
    %s84 = ssub.s32 %s17, %s29
    %p85 = scmp.eq.s32.totalorder %s84, 0
    %s87 = sadd.s32 %s86, 1
    %s88 = scalar_select %p85, %s86, %s87
    %p91 = pneg %p85
    %p92 = scmp.eq.s32.totalorder %s10, 1
    %p93 = por %p91, %p92
    %p94 = scmp.ne.s32.totalorder %s86, %s89
    %p95 = scmp.eq.s32.totalorder %s10, 0
    %p96 = por %p94, %p95
    %p97 = scmp.ne.s32.totalorder %s86, %s89
    %p98 = scmp.eq.s32.totalorder %s15, 1
    %p99 = por %p97, %p98
    %p100 = scmp.ne.s32.totalorder %s89, %s90
    %p101 = scmp.eq.s32.totalorder %s15, 0
    %p102 = por %p100, %p101
    %p103 = scmp.ne.s32.totalorder %s89, %s90
    %p104 = scmp.eq.s32.totalorder %s16, 1
    %p105 = por %p103, %p104
    %p107 = scmp.ne.s32.totalorder %s90, %s106
    %p108 = scmp.eq.s32.totalorder %s16, 0
    %p109 = por %p107, %p108
    %s110 = ssub.s32 %s17, %s29
    %p111 = scmp.eq.s32.totalorder %s110, 0
    %s113 = sadd.s32 %s112, 1
    %s114 = scalar_select %p111, %s112, %s113
    %p117 = pneg %p111
    %p118 = scmp.eq.s32.totalorder %s10, 1
    %p119 = por %p117, %p118
    %p120 = scmp.ne.s32.totalorder %s112, %s115
    %p121 = scmp.eq.s32.totalorder %s10, 0
    %p122 = por %p120, %p121
    %p123 = scmp.ne.s32.totalorder %s112, %s115
    %p124 = scmp.eq.s32.totalorder %s15, 1
    %p125 = por %p123, %p124
    %p126 = scmp.ne.s32.totalorder %s115, %s116
    %p127 = scmp.eq.s32.totalorder %s15, 0
    %p128 = por %p126, %p127
    %p129 = scmp.ne.s32.totalorder %s115, %s116
    %p130 = scmp.eq.s32.totalorder %s16, 1
    %p131 = por %p129, %p130
    %p133 = scmp.ne.s32.totalorder %s116, %s132
    %p134 = scmp.eq.s32.totalorder %s16, 0
    %p135 = por %p133, %p134
    %s136 = ssub.s32 %s17, %s29
    %s137 = ssub.s32 %s18, %s25
    %s138 = sor.u32 %s136, %s137
    %p139 = scmp.eq.s32.totalorder %s138, 0
    %s141 = sadd.s32 %s140, 1
    %s142 = scalar_select %p139, %s140, %s141
    %p145 = pneg %p139
    %p146 = scmp.eq.s32.totalorder %s10, 1
    %p147 = por %p145, %p146
    %p148 = scmp.ne.s32.totalorder %s140, %s143
    %p149 = scmp.eq.s32.totalorder %s10, 0
    %p150 = por %p148, %p149
    %p151 = scmp.ne.s32.totalorder %s140, %s143
    %p152 = scmp.eq.s32.totalorder %s15, 1
    %p153 = por %p151, %p152
    %p154 = scmp.ne.s32.totalorder %s143, %s144
    %p155 = scmp.eq.s32.totalorder %s15, 0
    %p156 = por %p154, %p155
    %p157 = scmp.ne.s32.totalorder %s143, %s144
    %p158 = scmp.eq.s32.totalorder %s16, 1
    %p159 = por %p157, %p158
    %p161 = scmp.ne.s32.totalorder %s144, %s160
    %p162 = scmp.eq.s32.totalorder %s16, 0
    %p163 = por %p161, %p162
    %p164 = scmp.le.s32.totalorder 1, %s10
    %p165 = scmp.lt.s32.totalorder %s10, 3
    %p166 = pnand %p164, %p165
    %p167 = pneg %p166
    // Predicated region
    $region9: #{tpu_custom_call.1} parent=5 // pred_check
      _
    $region10: #{tpu_custom_call.1} parent=5 // pred_check_branch
      %169 = sbr.rel (%p166) target = $region12
    $region11: #{tpu_custom_call.1} parent=5 // pred_region
      %s170 = ssub.s32 %s10, 1
    $region12: #{tpu_custom_call.1} parent=5 // pred_fallthru
      _
    %p171 = scmp.lt.s32.totalorder %s10, 2
    // Predicated region
    $region13: #{tpu_custom_call.1} parent=5 // pred_check
      %p172 = pneg %p171
    $region14: #{tpu_custom_call.1} parent=5 // pred_check_branch
      %174 = sbr.rel (%p172) target = $region16
    $region15: #{tpu_custom_call.1} parent=5 // pred_region
      // Predicated region
      $region17: #{tpu_custom_call.1} parent=15 // pred_check
        %p175 = pneg %p42
      $region18: #{tpu_custom_call.1} parent=15 // pred_check_branch
        %177 = sbr.rel (%p175) target = $region20
      $region19: #{tpu_custom_call.1} parent=15 // pred_region
        %p178 = scmp.lt.s32.totalorder %s17, 1
        %s179 = scalar_select %p178, %s17, 1
        %s180 = smul.addr %s179, 2
        %s181 = scalar_lea.vmem %s0, %s180
      $region20: #{tpu_custom_call.1} parent=15 // pred_fallthru
        _
      // Predicated region
      $region21: #{tpu_custom_call.1} parent=15 // pred_check
        %p182 = pneg %p70
      $region22: #{tpu_custom_call.1} parent=15 // pred_check_branch
        %184 = sbr.rel (%p182) target = $region24
      $region23: #{tpu_custom_call.1} parent=15 // pred_region
        %s185 = smul.u32 32, %s18
        %p186 = scmp.lt.s32.totalorder %s17, 1
        %s187 = scalar_select %p186, %s17, 1
        %p188 = scmp.lt.s32.totalorder %s185, 31
        %s189 = scalar_select %p188, %s185, 31
        %s190 = smul.addr %s187, 32
        %s191 = sadd.s32 %s189, %s190
        %s192 = smul.addr %s191, 4
        %s193 = scalar_lea.vmem %s1, %s192
        %s194 = smul.u32 32, %s18
      $region24: #{tpu_custom_call.1} parent=15 // pred_fallthru
        _
      // Predicated region
      $region25: #{tpu_custom_call.1} parent=15 // pred_check
        %p195 = pneg %p96
      $region26: #{tpu_custom_call.1} parent=15 // pred_check_branch
        %197 = sbr.rel (%p195) target = $region28
      $region27: #{tpu_custom_call.1} parent=15 // pred_region
        %p198 = scmp.lt.s32.totalorder %s17, 1
        %s199 = scalar_select %p198, %s17, 1
        %s200 = smul.addr %s199, 32
        %s201 = sadd.s32 %s200, 64
        %s202 = smul.addr %s201, 4
        %s203 = scalar_lea.vmem %s2, %s202
      $region28: #{tpu_custom_call.1} parent=15 // pred_fallthru
        _
      // Predicated region
      $region29: #{tpu_custom_call.1} parent=15 // pred_check
        %p204 = pneg %p122
      $region30: #{tpu_custom_call.1} parent=15 // pred_check_branch
        %206 = sbr.rel (%p204) target = $region32
      $region31: #{tpu_custom_call.1} parent=15 // pred_region
        %p207 = scmp.lt.s32.totalorder %s17, 1
        %s208 = scalar_select %p207, %s17, 1
        %s209 = smul.addr %s208, 32
        %s210 = sadd.s32 %s209, 128
        %s211 = smul.addr %s210, 4
        %s212 = scalar_lea.vmem %s3, %s211
      $region32: #{tpu_custom_call.1} parent=15 // pred_fallthru
        _
    $region16: #{tpu_custom_call.1} parent=5 // pred_fallthru
      _
    %p213 = scmp.le.s32.totalorder 1, %s10
    %p214 = scmp.lt.s32.totalorder %s10, 3
    %p215 = pnand %p213, %p214
    %p216 = pneg %p215
    // Predicated region
    $region33: #{tpu_custom_call.1} parent=5 // pred_check
      _
    $region34: #{tpu_custom_call.1} parent=5 // pred_check_branch
      %218 = sbr.rel (%p215) target = $region36
    $region35: #{tpu_custom_call.1} parent=5 // pred_region
      %s219 = ssub.s32 %s10, 1
      %p220 = scmp.lt.s32.totalorder %s19, 1
      %s221 = scalar_select %p220, %s19, 1
      %s222 = smul.addr %s221, 2
      %s223 = scalar_lea.vmem %s0, %s222
      %p224 = pneg %p48
      %p225 = pneg %p45
      %s226 = smul.u32 32, %s20
      %p227 = scmp.lt.s32.totalorder %s19, 1
      %s228 = scalar_select %p227, %s19, 1
      %p229 = scmp.lt.s32.totalorder %s226, 31
      %s230 = scalar_select %p229, %s226, 31
      %s231 = smul.addr %s228, 32
      %s232 = sadd.s32 %s230, %s231
      %s233 = smul.addr %s232, 4
      %s234 = scalar_lea.vmem %s1, %s233
      %p235 = pneg %p76
      %p236 = pneg %p73
      %p237 = scmp.lt.s32.totalorder %s19, 1
      %s238 = scalar_select %p237, %s19, 1
      %s239 = smul.addr %s238, 32
      %s240 = sadd.s32 %s239, 64
      %s241 = smul.addr %s240, 4
      %s242 = scalar_lea.vmem %s2, %s241
      %p243 = pneg %p102
      %p244 = pneg %p99
      %p245 = scmp.lt.s32.totalorder %s19, 1
      %s246 = scalar_select %p245, %s19, 1
      %s247 = smul.addr %s246, 32
      %s248 = sadd.s32 %s247, 128
      %s249 = smul.addr %s248, 4
      %s250 = scalar_lea.vmem %s3, %s249
      %p251 = pneg %p128
      %p252 = pneg %p125
      %p253 = pneg %p156
      %p254 = pneg %p153
      %s255 = smul.u32 32, %s20
      %p256 = scmp.lt.s32.totalorder %s19, 1
      %s257 = scalar_select %p256, %s19, 1
      %p258 = scmp.lt.s32.totalorder %s255, 31
      %s259 = scalar_select %p258, %s255, 31
      %s260 = smul.addr %s257, 32
      %s261 = sadd.s32 %s259, %s260
      %s262 = smul.addr %s261, 4
      %s263 = scalar_lea.vmem %s4, %s262
      %p264 = scmp.lt.s32.totalorder %s19, 1
      %s265 = scalar_select %p264, %s19, 1
      %s266 = smul.addr %s265, 2
      %s267 = scalar_lea.vmem %s0, %s266
      %s268 = smul.u32 32, %s20
      %p269 = scmp.lt.s32.totalorder %s19, 1
      %s270 = scalar_select %p269, %s19, 1
      %p271 = scmp.lt.s32.totalorder %s268, 31
      %s272 = scalar_select %p271, %s268, 31
      %s273 = smul.addr %s270, 32
      %s274 = sadd.s32 %s272, %s273
      %s275 = smul.addr %s274, 4
      %s276 = scalar_lea.vmem %s1, %s275
      %s277 = smul.u32 32, %s20
      %p278 = scmp.lt.s32.totalorder %s19, 1
      %s279 = scalar_select %p278, %s19, 1
      %s280 = smul.addr %s279, 32
      %s281 = sadd.s32 %s280, 64
      %s282 = smul.addr %s281, 4
      %s283 = scalar_lea.vmem %s2, %s282
      %p284 = scmp.lt.s32.totalorder %s19, 1
      %s285 = scalar_select %p284, %s19, 1
      %s286 = smul.addr %s285, 32
      %s287 = sadd.s32 %s286, 128
      %s288 = smul.addr %s287, 4
      %s289 = scalar_lea.vmem %s3, %s288
      %s290 = smul.u32 32, %s20
      %p291 = scmp.lt.s32.totalorder %s19, 1
      %s292 = scalar_select %p291, %s19, 1
      %p293 = scmp.lt.s32.totalorder %s290, 31
      %s294 = scalar_select %p293, %s290, 31
      %s295 = smul.addr %s292, 32
      %s296 = sadd.s32 %s294, %s295
      %s297 = smul.addr %s296, 4
      %s298 = scalar_lea.vmem %s4, %s297
      %s299 = smul.u32 32, %s20
      %v301 = vld [vmem:[%s276] sm:$0xf]
      %v302 = vld [vmem:[%s276 + $0x4] sm:$0xf]
      %v303 = vld [vmem:[%s276 + $0x8] sm:$0xf]
      %v304 = vld [vmem:[%s276 + $0xc] sm:$0xf]
      %v305 = vld [vmem:[%s276 + $0x10] sm:$0xf]
      %v306 = vld [vmem:[%s276 + $0x14] sm:$0xf]
      %v307 = vld [vmem:[%s276 + $0x18] sm:$0xf]
      %v308 = vld [vmem:[%s276 + $0x1c] sm:$0xf]
      %v309 = vld [vmem:[%s276 + $0x20] sm:$0xf]
      %v310 = vld [vmem:[%s276 + $0x24] sm:$0xf]
      %v311 = vld [vmem:[%s276 + $0x28] sm:$0xf]
      %v312 = vld [vmem:[%s276 + $0x2c] sm:$0xf]
      %v313 = vld [vmem:[%s276 + $0x30] sm:$0xf]
      %v314 = vld [vmem:[%s276 + $0x34] sm:$0xf]
      %v315 = vld [vmem:[%s276 + $0x38] sm:$0xf]
      %v316 = vld [vmem:[%s276 + $0x3c] sm:$0xf]
      %v317 = vld [vmem:[%s276 + $0x40] sm:$0xf]
      %v318 = vld [vmem:[%s276 + $0x44] sm:$0xf]
      %v319 = vld [vmem:[%s276 + $0x48] sm:$0xf]
      %v320 = vld [vmem:[%s276 + $0x4c] sm:$0xf]
      %v321 = vld [vmem:[%s276 + $0x50] sm:$0xf]
      %v322 = vld [vmem:[%s276 + $0x54] sm:$0xf]
      %v323 = vld [vmem:[%s276 + $0x58] sm:$0xf]
      %v324 = vld [vmem:[%s276 + $0x5c] sm:$0xf]
      %v325 = vld [vmem:[%s276 + $0x60] sm:$0xf]
      %v326 = vld [vmem:[%s276 + $0x64] sm:$0xf]
      %v327 = vld [vmem:[%s276 + $0x68] sm:$0xf]
      %v328 = vld [vmem:[%s276 + $0x6c] sm:$0xf]
      %v329 = vld [vmem:[%s276 + $0x70] sm:$0xf]
      %v330 = vld [vmem:[%s276 + $0x74] sm:$0xf]
      %v331 = vld [vmem:[%s276 + $0x78] sm:$0xf]
      %v332 = vld [vmem:[%s276 + $0x7c] sm:$0xf]
      %v333 = vld [vmem:[%s283] sm:$0xf]
      %v334 = vld [vmem:[%s283 + $0x4] sm:$0xf]
      %v335 = vld [vmem:[%s283 + $0x8] sm:$0xf]
      %v336 = vld [vmem:[%s283 + $0xc] sm:$0xf]
      %v337 = vld [vmem:[%s283 + $0x10] sm:$0xf]
      %v338 = vld [vmem:[%s283 + $0x14] sm:$0xf]
      %v339 = vld [vmem:[%s283 + $0x18] sm:$0xf]
      %v340 = vld [vmem:[%s283 + $0x1c] sm:$0xf]
      %v341 = vld [vmem:[%s283 + $0x20] sm:$0xf]
      %v342 = vld [vmem:[%s283 + $0x24] sm:$0xf]
      %v343 = vld [vmem:[%s283 + $0x28] sm:$0xf]
      %v344 = vld [vmem:[%s283 + $0x2c] sm:$0xf]
      %v345 = vld [vmem:[%s283 + $0x30] sm:$0xf]
      %v346 = vld [vmem:[%s283 + $0x34] sm:$0xf]
      %v347 = vld [vmem:[%s283 + $0x38] sm:$0xf]
      %v348 = vld [vmem:[%s283 + $0x3c] sm:$0xf]
      %v349 = vld [vmem:[%s283 + $0x40] sm:$0xf]
      %v350 = vld [vmem:[%s283 + $0x44] sm:$0xf]
      %v351 = vld [vmem:[%s283 + $0x48] sm:$0xf]
      %v352 = vld [vmem:[%s283 + $0x4c] sm:$0xf]
      %v353 = vld [vmem:[%s283 + $0x50] sm:$0xf]
      %v354 = vld [vmem:[%s283 + $0x54] sm:$0xf]
      %v355 = vld [vmem:[%s283 + $0x58] sm:$0xf]
      %v356 = vld [vmem:[%s283 + $0x5c] sm:$0xf]
      %v357 = vld [vmem:[%s283 + $0x60] sm:$0xf]
      %v358 = vld [vmem:[%s283 + $0x64] sm:$0xf]
      %v359 = vld [vmem:[%s283 + $0x68] sm:$0xf]
      %v360 = vld [vmem:[%s283 + $0x6c] sm:$0xf]
      %v361 = vld [vmem:[%s283 + $0x70] sm:$0xf]
      %v362 = vld [vmem:[%s283 + $0x74] sm:$0xf]
      %v363 = vld [vmem:[%s283 + $0x78] sm:$0xf]
      %v364 = vld [vmem:[%s283 + $0x7c] sm:$0xf]
      %v397 = vunpack.c.l.b16 %v301
      %v398 = vunpack.c.l.b16 %v302
      %v399 = vunpack.c.l.b16 %v303
      %v400 = vunpack.c.l.b16 %v304
      %v401 = vunpack.c.l.b16 %v305
      %v402 = vunpack.c.l.b16 %v306
      %v403 = vunpack.c.l.b16 %v307
      %v404 = vunpack.c.l.b16 %v308
      %v405 = vunpack.c.l.b16 %v309
      %v406 = vunpack.c.l.b16 %v310
      %v407 = vunpack.c.l.b16 %v311
      %v408 = vunpack.c.l.b16 %v312
      %v409 = vunpack.c.l.b16 %v313
      %v410 = vunpack.c.l.b16 %v314
      %v411 = vunpack.c.l.b16 %v315
      %v412 = vunpack.c.l.b16 %v316
      %v413 = vunpack.c.l.b16 %v317
      %v414 = vunpack.c.l.b16 %v318
      %v415 = vunpack.c.l.b16 %v319
      %v416 = vunpack.c.l.b16 %v320
      %v417 = vunpack.c.l.b16 %v321
      %v418 = vunpack.c.l.b16 %v322
      %v419 = vunpack.c.l.b16 %v323
      %v420 = vunpack.c.l.b16 %v324
      %v421 = vunpack.c.l.b16 %v325
      %v422 = vunpack.c.l.b16 %v326
      %v423 = vunpack.c.l.b16 %v327
      %v424 = vunpack.c.l.b16 %v328
      %v425 = vunpack.c.l.b16 %v329
      %v426 = vunpack.c.l.b16 %v330
      %v427 = vunpack.c.l.b16 %v331
      %v428 = vunpack.c.l.b16 %v332
      %v429 = vpack.c.b16 %v398, %v397
      %v430 = vpack.c.b16 %v400, %v399
      %v431 = vpack.c.b16 %v402, %v401
      %v432 = vpack.c.b16 %v404, %v403
      %v433 = vpack.c.b16 %v406, %v405
      %v434 = vpack.c.b16 %v408, %v407
      %v435 = vpack.c.b16 %v410, %v409
      %v436 = vpack.c.b16 %v412, %v411
      %v437 = vpack.c.b16 %v414, %v413
      %v438 = vpack.c.b16 %v416, %v415
      %v439 = vpack.c.b16 %v418, %v417
      %v440 = vpack.c.b16 %v420, %v419
      %v441 = vpack.c.b16 %v422, %v421
      %v442 = vpack.c.b16 %v424, %v423
      %v443 = vpack.c.b16 %v426, %v425
      %v444 = vpack.c.b16 %v428, %v427
      %v477 = vunpack.c.l.b16 %v333
      %v478 = vunpack.c.l.b16 %v334
      %v479 = vunpack.c.l.b16 %v335
      %v480 = vunpack.c.l.b16 %v336
      %v481 = vunpack.c.l.b16 %v337
      %v482 = vunpack.c.l.b16 %v338
      %v483 = vunpack.c.l.b16 %v339
      %v484 = vunpack.c.l.b16 %v340
      %v485 = vunpack.c.l.b16 %v341
      %v486 = vunpack.c.l.b16 %v342
      %v487 = vunpack.c.l.b16 %v343
      %v488 = vunpack.c.l.b16 %v344
      %v489 = vunpack.c.l.b16 %v345
      %v490 = vunpack.c.l.b16 %v346
      %v491 = vunpack.c.l.b16 %v347
      %v492 = vunpack.c.l.b16 %v348
      %v493 = vunpack.c.l.b16 %v349
      %v494 = vunpack.c.l.b16 %v350
      %v495 = vunpack.c.l.b16 %v351
      %v496 = vunpack.c.l.b16 %v352
      %v497 = vunpack.c.l.b16 %v353
      %v498 = vunpack.c.l.b16 %v354
      %v499 = vunpack.c.l.b16 %v355
      %v500 = vunpack.c.l.b16 %v356
      %v501 = vunpack.c.l.b16 %v357
      %v502 = vunpack.c.l.b16 %v358
      %v503 = vunpack.c.l.b16 %v359
      %v504 = vunpack.c.l.b16 %v360
      %v505 = vunpack.c.l.b16 %v361
      %v506 = vunpack.c.l.b16 %v362
      %v507 = vunpack.c.l.b16 %v363
      %v508 = vunpack.c.l.b16 %v364
      %v509 = vpack.c.b16 %v478, %v477
      %v510 = vpack.c.b16 %v480, %v479
      %v511 = vpack.c.b16 %v482, %v481
      %v512 = vpack.c.b16 %v484, %v483
      %v513 = vpack.c.b16 %v486, %v485
      %v514 = vpack.c.b16 %v488, %v487
      %v515 = vpack.c.b16 %v490, %v489
      %v516 = vpack.c.b16 %v492, %v491
      %v517 = vpack.c.b16 %v494, %v493
      %v518 = vpack.c.b16 %v496, %v495
      %v519 = vpack.c.b16 %v498, %v497
      %v520 = vpack.c.b16 %v500, %v499
      %v521 = vpack.c.b16 %v502, %v501
      %v522 = vpack.c.b16 %v504, %v503
      %v523 = vpack.c.b16 %v506, %v505
      %v524 = vpack.c.b16 %v508, %v507
      %vm525 = vcmask 261120
      %v527 = vsel %vm525, %v429, 0
      %v530 = vsel %vm525, %v430, 0
      %v533 = vsel %vm525, %v431, 0
      %v536 = vsel %vm525, %v432, 0
      %v539 = vsel %vm525, %v433, 0
      %v542 = vsel %vm525, %v434, 0
      %v545 = vsel %vm525, %v435, 0
      %v548 = vsel %vm525, %v436, 0
      %v551 = vsel %vm525, %v437, 0
      %v554 = vsel %vm525, %v438, 0
      %v557 = vsel %vm525, %v439, 0
      %v560 = vsel %vm525, %v440, 0
      %v563 = vsel %vm525, %v441, 0
      %v566 = vsel %vm525, %v442, 0
      %v569 = vsel %vm525, %v443, 0
      %v572 = vsel %vm525, %v444, 0
      %v575 = vsel %vm525, %v509, 0
      %v578 = vsel %vm525, %v510, 0
      %v581 = vsel %vm525, %v511, 0
      %v584 = vsel %vm525, %v512, 0
      %v587 = vsel %vm525, %v513, 0
      %v590 = vsel %vm525, %v514, 0
      %v593 = vsel %vm525, %v515, 0
      %v596 = vsel %vm525, %v516, 0
      %v599 = vsel %vm525, %v517, 0
      %v602 = vsel %vm525, %v518, 0
      %v605 = vsel %vm525, %v519, 0
      %v608 = vsel %vm525, %v520, 0
      %v611 = vsel %vm525, %v521, 0
      %v614 = vsel %vm525, %v522, 0
      %v617 = vsel %vm525, %v523, 0
      %v620 = vsel %vm525, %v524, 0
      %622 = vmatprep.subr.bf16.mxu0 0
      %623 = vmatpush1.bf16.xpose.msra.mxu0 %v575
      %624 = vmatprep.subr.bf16.mxu0 0
      %625 = vmatpush1.bf16.xpose.msra.mxu0 %v578
      %626 = vmatprep.subr.bf16.mxu0 0
      %627 = vmatpush1.bf16.xpose.msra.mxu0 %v581
      %628 = vmatprep.subr.bf16.mxu0 0
      %629 = vmatpush1.bf16.xpose.msra.mxu0 %v584
      %630 = vmatprep.subr.bf16.mxu0 0
      %631 = vmatpush1.bf16.xpose.msra.mxu0 %v587
      %632 = vmatprep.subr.bf16.mxu0 0
      %633 = vmatpush1.bf16.xpose.msra.mxu0 %v590
      %634 = vmatprep.subr.bf16.mxu0 0
      %635 = vmatpush1.bf16.xpose.msra.mxu0 %v593
      %636 = vmatprep.subr.bf16.mxu0 0
      %637 = vmatpush1.bf16.xpose.msra.mxu0 %v596
      %638 = vmatprep.subr.bf16.mxu0 0
      %639 = vmatpush1.bf16.xpose.msra.mxu0 %v599
      %640 = vmatprep.subr.bf16.mxu0 0
      %641 = vmatpush1.bf16.xpose.msra.mxu0 %v602
      %642 = vmatprep.subr.bf16.mxu0 0
      %643 = vmatpush1.bf16.xpose.msra.mxu0 %v605
      %644 = vmatprep.subr.bf16.mxu0 0
      %645 = vmatpush1.bf16.xpose.msra.mxu0 %v608
      %646 = vmatprep.subr.bf16.mxu0 0
      %647 = vmatpush1.bf16.xpose.msra.mxu0 %v611
      %648 = vmatprep.subr.bf16.mxu0 0
      %649 = vmatpush1.bf16.xpose.msra.mxu0 %v614
      %650 = vmatprep.subr.bf16.mxu0 0
      %651 = vmatpush1.bf16.xpose.msra.mxu0 %v617
      %652 = vmatprep.subr.bf16.mxu0 0
      %653 = vmatpush1.bf16.xpose.msra.mxu0 %v620
      %654 = vmatprep.mubr.bf16.mxu0 0
      %655 = vmatmul.mubr.bf16.gmra.mrb[0].mxu0 %v527
      %v656 = vpop.f32.mrb[0].mxu0
      %v657 = vadd.f32 0.0, %v656
      %v658 = vpop.f32.mrb[0].mxu0
      %v659 = vadd.f32 0.0, %v658
      %v660 = vpop.f32.mrb[0].mxu0
      %v661 = vadd.f32 0.0, %v660
      %v662 = vpop.f32.mrb[0].mxu0
      %v663 = vadd.f32 0.0, %v662
      %664 = vmatprep.mubr.bf16.mxu0 0
      %665 = vmatmul.mubr.bf16.gmra.mrb[0].mxu0 %v530
      %v666 = vpop.f32.mrb[0].mxu0
      %v667 = vadd.f32 0.0, %v666
      %v668 = vpop.f32.mrb[0].mxu0
      %v669 = vadd.f32 0.0, %v668
      %v670 = vpop.f32.mrb[0].mxu0
      %v671 = vadd.f32 0.0, %v670
      %v672 = vpop.f32.mrb[0].mxu0
      %v673 = vadd.f32 0.0, %v672
      %674 = vmatprep.mubr.bf16.mxu0 0
      %675 = vmatmul.mubr.bf16.gmra.mrb[0].mxu0 %v533
      %v676 = vpop.f32.mrb[0].mxu0
      %v677 = vadd.f32 0.0, %v676
      %v678 = vpop.f32.mrb[0].mxu0
      %v679 = vadd.f32 0.0, %v678
      %v680 = vpop.f32.mrb[0].mxu0
      %v681 = vadd.f32 0.0, %v680
      %v682 = vpop.f32.mrb[0].mxu0
      %v683 = vadd.f32 0.0, %v682
      %684 = vmatprep.mubr.bf16.mxu0 0
      %685 = vmatmul.mubr.bf16.gmra.mrb[0].mxu0 %v536
      %v686 = vpop.f32.mrb[0].mxu0
      %v687 = vadd.f32 0.0, %v686
      %v688 = vpop.f32.mrb[0].mxu0
      %v689 = vadd.f32 0.0, %v688
      %v690 = vpop.f32.mrb[0].mxu0
      %v691 = vadd.f32 0.0, %v690
      %v692 = vpop.f32.mrb[0].mxu0
      %v693 = vadd.f32 0.0, %v692
      %694 = vmatprep.mubr.bf16.mxu0 0
      %695 = vmatmul.mubr.bf16.gmra.mrb[0].mxu0 %v539
      %v696 = vpop.f32.mrb[0].mxu0
      %v697 = vadd.f32 0.0, %v696
      %v698 = vpop.f32.mrb[0].mxu0
      %v699 = vadd.f32 0.0, %v698
      %v700 = vpop.f32.mrb[0].mxu0
      %v701 = vadd.f32 0.0, %v700
      %v702 = vpop.f32.mrb[0].mxu0
      %v703 = vadd.f32 0.0, %v702
      %704 = vmatprep.mubr.bf16.mxu0 0
      %705 = vmatmul.mubr.bf16.gmra.mrb[0].mxu0 %v542
      %v706 = vpop.f32.mrb[0].mxu0
      %v707 = vadd.f32 0.0, %v706
      %v708 = vpop.f32.mrb[0].mxu0
      %v709 = vadd.f32 0.0, %v708
      %v710 = vpop.f32.mrb[0].mxu0
      %v711 = vadd.f32 0.0, %v710
      %v712 = vpop.f32.mrb[0].mxu0
      %v713 = vadd.f32 0.0, %v712
      %714 = vmatprep.mubr.bf16.mxu0 0
      %715 = vmatmul.mubr.bf16.gmra.mrb[0].mxu0 %v545
      %v716 = vpop.f32.mrb[0].mxu0
      %v717 = vadd.f32 0.0, %v716
      %v718 = vpop.f32.mrb[0].mxu0
      %v719 = vadd.f32 0.0, %v718
      %v720 = vpop.f32.mrb[0].mxu0
      %v721 = vadd.f32 0.0, %v720
      %v722 = vpop.f32.mrb[0].mxu0
      %v723 = vadd.f32 0.0, %v722
      %724 = vmatprep.mubr.bf16.mxu0 0
      %725 = vmatmul.mubr.bf16.gmra.mrb[0].mxu0 %v548
      %v726 = vpop.f32.mrb[0].mxu0
      %v727 = vadd.f32 0.0, %v726
      %v728 = vpop.f32.mrb[0].mxu0
      %v729 = vadd.f32 0.0, %v728
      %v730 = vpop.f32.mrb[0].mxu0
      %v731 = vadd.f32 0.0, %v730
      %v732 = vpop.f32.mrb[0].mxu0
      %v733 = vadd.f32 0.0, %v732
      %734 = vmatprep.mubr.bf16.mxu0 0
      %735 = vmatmul.mubr.bf16.gmra.mrb[0].mxu0 %v551
      %v736 = vpop.f32.mrb[0].mxu0
      %v737 = vadd.f32 0.0, %v736
      %v738 = vpop.f32.mrb[0].mxu0
      %v739 = vadd.f32 0.0, %v738
      %v740 = vpop.f32.mrb[0].mxu0
      %v741 = vadd.f32 0.0, %v740
      %v742 = vpop.f32.mrb[0].mxu0
      %v743 = vadd.f32 0.0, %v742
      %744 = vmatprep.mubr.bf16.mxu0 0
      %745 = vmatmul.mubr.bf16.gmra.mrb[0].mxu0 %v554
      %v746 = vpop.f32.mrb[0].mxu0
      %v747 = vadd.f32 0.0, %v746
      %v748 = vpop.f32.mrb[0].mxu0
      %v749 = vadd.f32 0.0, %v748
      %v750 = vpop.f32.mrb[0].mxu0
      %v751 = vadd.f32 0.0, %v750
      %v752 = vpop.f32.mrb[0].mxu0
      %v753 = vadd.f32 0.0, %v752
      %754 = vmatprep.mubr.bf16.mxu0 0
      %755 = vmatmul.mubr.bf16.gmra.mrb[0].mxu0 %v557
      %v756 = vpop.f32.mrb[0].mxu0
      %v757 = vadd.f32 0.0, %v756
      %v758 = vpop.f32.mrb[0].mxu0
      %v759 = vadd.f32 0.0, %v758
      %v760 = vpop.f32.mrb[0].mxu0
      %v761 = vadd.f32 0.0, %v760
      %v762 = vpop.f32.mrb[0].mxu0
      %v763 = vadd.f32 0.0, %v762
      %764 = vmatprep.mubr.bf16.mxu0 0
      %765 = vmatmul.mubr.bf16.gmra.mrb[0].mxu0 %v560
      %v766 = vpop.f32.mrb[0].mxu0
      %v767 = vadd.f32 0.0, %v766
      %v768 = vpop.f32.mrb[0].mxu0
      %v769 = vadd.f32 0.0, %v768
      %v770 = vpop.f32.mrb[0].mxu0
      %v771 = vadd.f32 0.0, %v770
      %v772 = vpop.f32.mrb[0].mxu0
      %v773 = vadd.f32 0.0, %v772
      %774 = vmatprep.mubr.bf16.mxu0 0
      %775 = vmatmul.mubr.bf16.gmra.mrb[0].mxu0 %v563
      %v776 = vpop.f32.mrb[0].mxu0
      %v777 = vadd.f32 0.0, %v776
      %v778 = vpop.f32.mrb[0].mxu0
      %v779 = vadd.f32 0.0, %v778
      %v780 = vpop.f32.mrb[0].mxu0
      %v781 = vadd.f32 0.0, %v780
      %v782 = vpop.f32.mrb[0].mxu0
      %v783 = vadd.f32 0.0, %v782
      %784 = vmatprep.mubr.bf16.mxu0 0
      %785 = vmatmul.mubr.bf16.gmra.mrb[0].mxu0 %v566
      %v786 = vpop.f32.mrb[0].mxu0
      %v787 = vadd.f32 0.0, %v786
      %v788 = vpop.f32.mrb[0].mxu0
      %v789 = vadd.f32 0.0, %v788
      %v790 = vpop.f32.mrb[0].mxu0
      %v791 = vadd.f32 0.0, %v790
      %v792 = vpop.f32.mrb[0].mxu0
      %v793 = vadd.f32 0.0, %v792
      %794 = vmatprep.mubr.bf16.mxu0 0
      %795 = vmatmul.mubr.bf16.gmra.mrb[0].mxu0 %v569
      %v796 = vpop.f32.mrb[0].mxu0
      %v797 = vadd.f32 0.0, %v796
      %v798 = vpop.f32.mrb[0].mxu0
      %v799 = vadd.f32 0.0, %v798
      %v800 = vpop.f32.mrb[0].mxu0
      %v801 = vadd.f32 0.0, %v800
      %v802 = vpop.f32.mrb[0].mxu0
      %v803 = vadd.f32 0.0, %v802
      %804 = vmatprep.mubr.bf16.mxu0 0
      %805 = vmatmul.mubr.bf16.gmra.mrb[0].mxu0 %v572
      %v806 = vpop.f32.mrb[0].mxu0
      %v807 = vadd.f32 0.0, %v806
      %v808 = vpop.f32.mrb[0].mxu0
      %v809 = vadd.f32 0.0, %v808
      %v810 = vpop.f32.mrb[0].mxu0
      %v811 = vadd.f32 0.0, %v810
      %v812 = vpop.f32.mrb[0].mxu0
      %v813 = vadd.f32 0.0, %v812
      %814 = vdwg.mxu0
      %v815 = vunpack.c.l.bf16 %v301
      %v816 = vunpack.c.l.bf16 %v302
      %v817 = vunpack.c.l.bf16 %v303
      %v818 = vunpack.c.l.bf16 %v304
      %v819 = vunpack.c.l.bf16 %v305
      %v820 = vunpack.c.l.bf16 %v306
      %v821 = vunpack.c.l.bf16 %v307
      %v822 = vunpack.c.l.bf16 %v308
      %v823 = vunpack.c.l.bf16 %v309
      %v824 = vunpack.c.l.bf16 %v310
      %v825 = vunpack.c.l.bf16 %v311
      %v826 = vunpack.c.l.bf16 %v312
      %v827 = vunpack.c.l.bf16 %v313
      %v828 = vunpack.c.l.bf16 %v314
      %v829 = vunpack.c.l.bf16 %v315
      %v830 = vunpack.c.l.bf16 %v316
      %v831 = vunpack.c.l.bf16 %v317
      %v832 = vunpack.c.l.bf16 %v318
      %v833 = vunpack.c.l.bf16 %v319
      %v834 = vunpack.c.l.bf16 %v320
      %v835 = vunpack.c.l.bf16 %v321
      %v836 = vunpack.c.l.bf16 %v322
      %v837 = vunpack.c.l.bf16 %v323
      %v838 = vunpack.c.l.bf16 %v324
      %v839 = vunpack.c.l.bf16 %v325
      %v840 = vunpack.c.l.bf16 %v326
      %v841 = vunpack.c.l.bf16 %v327
      %v842 = vunpack.c.l.bf16 %v328
      %v843 = vunpack.c.l.bf16 %v329
      %v844 = vunpack.c.l.bf16 %v330
      %v845 = vunpack.c.l.bf16 %v331
      %v846 = vunpack.c.l.bf16 %v332
      %v847 = vmul.f32 %v815, %v815
      %v848 = vmul.f32 %v816, %v816
      %v849 = vmul.f32 %v817, %v817
      %v850 = vmul.f32 %v818, %v818
      %v851 = vmul.f32 %v819, %v819
      %v852 = vmul.f32 %v820, %v820
      %v853 = vmul.f32 %v821, %v821
      %v854 = vmul.f32 %v822, %v822
      %v855 = vmul.f32 %v823, %v823
      %v856 = vmul.f32 %v824, %v824
      %v857 = vmul.f32 %v825, %v825
      %v858 = vmul.f32 %v826, %v826
      %v859 = vmul.f32 %v827, %v827
      %v860 = vmul.f32 %v828, %v828
      %v861 = vmul.f32 %v829, %v829
      %v862 = vmul.f32 %v830, %v830
      %v863 = vmul.f32 %v831, %v831
      %v864 = vmul.f32 %v832, %v832
      %v865 = vmul.f32 %v833, %v833
      %v866 = vmul.f32 %v834, %v834
      %v867 = vmul.f32 %v835, %v835
      %v868 = vmul.f32 %v836, %v836
      %v869 = vmul.f32 %v837, %v837
      %v870 = vmul.f32 %v838, %v838
      %v871 = vmul.f32 %v839, %v839
      %v872 = vmul.f32 %v840, %v840
      %v873 = vmul.f32 %v841, %v841
      %v874 = vmul.f32 %v842, %v842
      %v875 = vmul.f32 %v843, %v843
      %v876 = vmul.f32 %v844, %v844
      %v877 = vmul.f32 %v845, %v845
      %v878 = vmul.f32 %v846, %v846
      %v879 = vsel %vm525, %v847, 0.0
      %880 = vadd.xlane.f32.xlu0 %v879
      %v881 = vpop.xlane.xlu0 %880
      %v882 = vsel %vm525, %v848, 0.0
      %883 = vadd.xlane.f32.xlu0 %v882
      %v884 = vpop.xlane.xlu0 %883
      %v885 = vsel %vm525, %v849, 0.0
      %886 = vadd.xlane.f32.xlu0 %v885
      %v887 = vpop.xlane.xlu0 %886
      %v888 = vsel %vm525, %v850, 0.0
      %889 = vadd.xlane.f32.xlu0 %v888
      %v890 = vpop.xlane.xlu0 %889
      %v891 = vsel %vm525, %v851, 0.0
      %892 = vadd.xlane.f32.xlu0 %v891
      %v893 = vpop.xlane.xlu0 %892
      %v894 = vsel %vm525, %v852, 0.0
      %895 = vadd.xlane.f32.xlu0 %v894
      %v896 = vpop.xlane.xlu0 %895
      %v897 = vsel %vm525, %v853, 0.0
      %898 = vadd.xlane.f32.xlu0 %v897
      %v899 = vpop.xlane.xlu0 %898
      %v900 = vsel %vm525, %v854, 0.0
      %901 = vadd.xlane.f32.xlu0 %v900
      %v902 = vpop.xlane.xlu0 %901
      %v903 = vsel %vm525, %v855, 0.0
      %904 = vadd.xlane.f32.xlu0 %v903
      %v905 = vpop.xlane.xlu0 %904
      %v906 = vsel %vm525, %v856, 0.0
      %907 = vadd.xlane.f32.xlu0 %v906
      %v908 = vpop.xlane.xlu0 %907
      %v909 = vsel %vm525, %v857, 0.0
      %910 = vadd.xlane.f32.xlu0 %v909
      %v911 = vpop.xlane.xlu0 %910
      %v912 = vsel %vm525, %v858, 0.0
      %913 = vadd.xlane.f32.xlu0 %v912
      %v914 = vpop.xlane.xlu0 %913
      %v915 = vsel %vm525, %v859, 0.0
      %916 = vadd.xlane.f32.xlu0 %v915
      %v917 = vpop.xlane.xlu0 %916
      %v918 = vsel %vm525, %v860, 0.0
      %919 = vadd.xlane.f32.xlu0 %v918
      %v920 = vpop.xlane.xlu0 %919
      %v921 = vsel %vm525, %v861, 0.0
      %922 = vadd.xlane.f32.xlu0 %v921
      %v923 = vpop.xlane.xlu0 %922
      %v924 = vsel %vm525, %v862, 0.0
      %925 = vadd.xlane.f32.xlu0 %v924
      %v926 = vpop.xlane.xlu0 %925
      %v927 = vsel %vm525, %v863, 0.0
      %928 = vadd.xlane.f32.xlu0 %v927
      %v929 = vpop.xlane.xlu0 %928
      %v930 = vsel %vm525, %v864, 0.0
      %931 = vadd.xlane.f32.xlu0 %v930
      %v932 = vpop.xlane.xlu0 %931
      %v933 = vsel %vm525, %v865, 0.0
      %934 = vadd.xlane.f32.xlu0 %v933
      %v935 = vpop.xlane.xlu0 %934
      %v936 = vsel %vm525, %v866, 0.0
      %937 = vadd.xlane.f32.xlu0 %v936
      %v938 = vpop.xlane.xlu0 %937
      %v939 = vsel %vm525, %v867, 0.0
      %940 = vadd.xlane.f32.xlu0 %v939
      %v941 = vpop.xlane.xlu0 %940
      %v942 = vsel %vm525, %v868, 0.0
      %943 = vadd.xlane.f32.xlu0 %v942
      %v944 = vpop.xlane.xlu0 %943
      %v945 = vsel %vm525, %v869, 0.0
      %946 = vadd.xlane.f32.xlu0 %v945
      %v947 = vpop.xlane.xlu0 %946
      %v948 = vsel %vm525, %v870, 0.0
      %949 = vadd.xlane.f32.xlu0 %v948
      %v950 = vpop.xlane.xlu0 %949
      %v951 = vsel %vm525, %v871, 0.0
      %952 = vadd.xlane.f32.xlu0 %v951
      %v953 = vpop.xlane.xlu0 %952
      %v954 = vsel %vm525, %v872, 0.0
      %955 = vadd.xlane.f32.xlu0 %v954
      %v956 = vpop.xlane.xlu0 %955
      %v957 = vsel %vm525, %v873, 0.0
      %958 = vadd.xlane.f32.xlu0 %v957
      %v959 = vpop.xlane.xlu0 %958
      %v960 = vsel %vm525, %v874, 0.0
      %961 = vadd.xlane.f32.xlu0 %v960
      %v962 = vpop.xlane.xlu0 %961
      %v963 = vsel %vm525, %v875, 0.0
      %964 = vadd.xlane.f32.xlu0 %v963
      %v965 = vpop.xlane.xlu0 %964
      %v966 = vsel %vm525, %v876, 0.0
      %967 = vadd.xlane.f32.xlu0 %v966
      %v968 = vpop.xlane.xlu0 %967
      %v969 = vsel %vm525, %v877, 0.0
      %970 = vadd.xlane.f32.xlu0 %v969
      %v971 = vpop.xlane.xlu0 %970
      %v972 = vsel %vm525, %v878, 0.0
      %973 = vadd.xlane.f32.xlu0 %v972
      %v974 = vpop.xlane.xlu0 %973
      %v975 = vld [vmem:[%s267] sm:$0x3]
      %v977 = vlaneseq
      %v978 = vshrl.u32 %v977, 7
      %v979 = vsub.s32 0, %v978
      %v980 = vrot.slane %v975, %v979
      %v981 = vlaneseq
      %v982 = vshrl.u32 %v981, 7
      %v983 = vsub.s32 1, %v982
      %v984 = vrot.slane %v975, %v983
      %v987 = vadd.f32 %v881, %v980
      %v988 = vadd.f32 %v881, %v984
      %v989 = vadd.f32 %v884, %v980
      %v990 = vadd.f32 %v884, %v984
      %v991 = vadd.f32 %v887, %v980
      %v992 = vadd.f32 %v887, %v984
      %v993 = vadd.f32 %v890, %v980
      %v994 = vadd.f32 %v890, %v984
      %v995 = vadd.f32 %v893, %v980
      %v996 = vadd.f32 %v893, %v984
      %v997 = vadd.f32 %v896, %v980
      %v998 = vadd.f32 %v896, %v984
      %v999 = vadd.f32 %v899, %v980
      %v1000 = vadd.f32 %v899, %v984
      %v1001 = vadd.f32 %v902, %v980
      %v1002 = vadd.f32 %v902, %v984
      %v1003 = vadd.f32 %v905, %v980
      %v1004 = vadd.f32 %v905, %v984
      %v1005 = vadd.f32 %v908, %v980
      %v1006 = vadd.f32 %v908, %v984
      %v1007 = vadd.f32 %v911, %v980
      %v1008 = vadd.f32 %v911, %v984
      %v1009 = vadd.f32 %v914, %v980
      %v1010 = vadd.f32 %v914, %v984
      %v1011 = vadd.f32 %v917, %v980
      %v1012 = vadd.f32 %v917, %v984
      %v1013 = vadd.f32 %v920, %v980
      %v1014 = vadd.f32 %v920, %v984
      %v1015 = vadd.f32 %v923, %v980
      %v1016 = vadd.f32 %v923, %v984
      %v1017 = vadd.f32 %v926, %v980
      %v1018 = vadd.f32 %v926, %v984
      %v1019 = vadd.f32 %v929, %v980
      %v1020 = vadd.f32 %v929, %v984
      %v1021 = vadd.f32 %v932, %v980
      %v1022 = vadd.f32 %v932, %v984
      %v1023 = vadd.f32 %v935, %v980
      %v1024 = vadd.f32 %v935, %v984
      %v1025 = vadd.f32 %v938, %v980
      %v1026 = vadd.f32 %v938, %v984
      %v1027 = vadd.f32 %v941, %v980
      %v1028 = vadd.f32 %v941, %v984
      %v1029 = vadd.f32 %v944, %v980
      %v1030 = vadd.f32 %v944, %v984
      %v1031 = vadd.f32 %v947, %v980
      %v1032 = vadd.f32 %v947, %v984
      %v1033 = vadd.f32 %v950, %v980
      %v1034 = vadd.f32 %v950, %v984
      %v1035 = vadd.f32 %v953, %v980
      %v1036 = vadd.f32 %v953, %v984
      %v1037 = vadd.f32 %v956, %v980
      %v1038 = vadd.f32 %v956, %v984
      %v1039 = vadd.f32 %v959, %v980
      %v1040 = vadd.f32 %v959, %v984
      %v1041 = vadd.f32 %v962, %v980
      %v1042 = vadd.f32 %v962, %v984
      %v1043 = vadd.f32 %v965, %v980
      %v1044 = vadd.f32 %v965, %v984
      %v1045 = vadd.f32 %v968, %v980
      %v1046 = vadd.f32 %v968, %v984
      %v1047 = vadd.f32 %v971, %v980
      %v1048 = vadd.f32 %v971, %v984
      %v1049 = vadd.f32 %v974, %v980
      %v1050 = vadd.f32 %v974, %v984
      %v1051 = vmul.f32 %v657, 2.0
      %v1052 = vmul.f32 %v659, 2.0
      %v1053 = vmul.f32 %v661, 2.0
      %v1054 = vmul.f32 %v663, 2.0
      %v1055 = vmul.f32 %v667, 2.0
      %v1056 = vmul.f32 %v669, 2.0
      %v1057 = vmul.f32 %v671, 2.0
      %v1058 = vmul.f32 %v673, 2.0
      %v1059 = vmul.f32 %v677, 2.0
      %v1060 = vmul.f32 %v679, 2.0
      %v1061 = vmul.f32 %v681, 2.0
      %v1062 = vmul.f32 %v683, 2.0
      %v1063 = vmul.f32 %v687, 2.0
      %v1064 = vmul.f32 %v689, 2.0
      %v1065 = vmul.f32 %v691, 2.0
      %v1066 = vmul.f32 %v693, 2.0
      %v1067 = vmul.f32 %v697, 2.0
      %v1068 = vmul.f32 %v699, 2.0
      %v1069 = vmul.f32 %v701, 2.0
      %v1070 = vmul.f32 %v703, 2.0
      %v1071 = vmul.f32 %v707, 2.0
      %v1072 = vmul.f32 %v709, 2.0
      %v1073 = vmul.f32 %v711, 2.0
      %v1074 = vmul.f32 %v713, 2.0
      %v1075 = vmul.f32 %v717, 2.0
      %v1076 = vmul.f32 %v719, 2.0
      %v1077 = vmul.f32 %v721, 2.0
      %v1078 = vmul.f32 %v723, 2.0
      %v1079 = vmul.f32 %v727, 2.0
      %v1080 = vmul.f32 %v729, 2.0
      %v1081 = vmul.f32 %v731, 2.0
      %v1082 = vmul.f32 %v733, 2.0
      %v1083 = vmul.f32 %v737, 2.0
      %v1084 = vmul.f32 %v739, 2.0
      %v1085 = vmul.f32 %v741, 2.0
      %v1086 = vmul.f32 %v743, 2.0
      %v1087 = vmul.f32 %v747, 2.0
      %v1088 = vmul.f32 %v749, 2.0
      %v1089 = vmul.f32 %v751, 2.0
      %v1090 = vmul.f32 %v753, 2.0
      %v1091 = vmul.f32 %v757, 2.0
      %v1092 = vmul.f32 %v759, 2.0
      %v1093 = vmul.f32 %v761, 2.0
      %v1094 = vmul.f32 %v763, 2.0
      %v1095 = vmul.f32 %v767, 2.0
      %v1096 = vmul.f32 %v769, 2.0
      %v1097 = vmul.f32 %v771, 2.0
      %v1098 = vmul.f32 %v773, 2.0
      %v1099 = vmul.f32 %v777, 2.0
      %v1100 = vmul.f32 %v779, 2.0
      %v1101 = vmul.f32 %v781, 2.0
      %v1102 = vmul.f32 %v783, 2.0
      %v1103 = vmul.f32 %v787, 2.0
      %v1104 = vmul.f32 %v789, 2.0
      %v1105 = vmul.f32 %v791, 2.0
      %v1106 = vmul.f32 %v793, 2.0
      %v1107 = vmul.f32 %v797, 2.0
      %v1108 = vmul.f32 %v799, 2.0
      %v1109 = vmul.f32 %v801, 2.0
      %v1110 = vmul.f32 %v803, 2.0
      %v1111 = vmul.f32 %v807, 2.0
      %v1112 = vmul.f32 %v809, 2.0
      %v1113 = vmul.f32 %v811, 2.0
      %v1114 = vmul.f32 %v813, 2.0
      %v1115 = vsub.f32 %v987, %v1051
      %v1116 = vsub.f32 %v988, %v1052
      %v1117 = vsub.f32 %v989, %v1053
      %v1118 = vsub.f32 %v990, %v1054
      %v1119 = vsub.f32 %v991, %v1055
      %v1120 = vsub.f32 %v992, %v1056
      %v1121 = vsub.f32 %v993, %v1057
      %v1122 = vsub.f32 %v994, %v1058
      %v1123 = vsub.f32 %v995, %v1059
      %v1124 = vsub.f32 %v996, %v1060
      %v1125 = vsub.f32 %v997, %v1061
      %v1126 = vsub.f32 %v998, %v1062
      %v1127 = vsub.f32 %v999, %v1063
      %v1128 = vsub.f32 %v1000, %v1064
      %v1129 = vsub.f32 %v1001, %v1065
      %v1130 = vsub.f32 %v1002, %v1066
      %v1131 = vsub.f32 %v1003, %v1067
      %v1132 = vsub.f32 %v1004, %v1068
      %v1133 = vsub.f32 %v1005, %v1069
      %v1134 = vsub.f32 %v1006, %v1070
      %v1135 = vsub.f32 %v1007, %v1071
      %v1136 = vsub.f32 %v1008, %v1072
      %v1137 = vsub.f32 %v1009, %v1073
      %v1138 = vsub.f32 %v1010, %v1074
      %v1139 = vsub.f32 %v1011, %v1075
      %v1140 = vsub.f32 %v1012, %v1076
      %v1141 = vsub.f32 %v1013, %v1077
      %v1142 = vsub.f32 %v1014, %v1078
      %v1143 = vsub.f32 %v1015, %v1079
      %v1144 = vsub.f32 %v1016, %v1080
      %v1145 = vsub.f32 %v1017, %v1081
      %v1146 = vsub.f32 %v1018, %v1082
      %v1147 = vsub.f32 %v1019, %v1083
      %v1148 = vsub.f32 %v1020, %v1084
      %v1149 = vsub.f32 %v1021, %v1085
      %v1150 = vsub.f32 %v1022, %v1086
      %v1151 = vsub.f32 %v1023, %v1087
      %v1152 = vsub.f32 %v1024, %v1088
      %v1153 = vsub.f32 %v1025, %v1089
      %v1154 = vsub.f32 %v1026, %v1090
      %v1155 = vsub.f32 %v1027, %v1091
      %v1156 = vsub.f32 %v1028, %v1092
      %v1157 = vsub.f32 %v1029, %v1093
      %v1158 = vsub.f32 %v1030, %v1094
      %v1159 = vsub.f32 %v1031, %v1095
      %v1160 = vsub.f32 %v1032, %v1096
      %v1161 = vsub.f32 %v1033, %v1097
      %v1162 = vsub.f32 %v1034, %v1098
      %v1163 = vsub.f32 %v1035, %v1099
      %v1164 = vsub.f32 %v1036, %v1100
      %v1165 = vsub.f32 %v1037, %v1101
      %v1166 = vsub.f32 %v1038, %v1102
      %v1167 = vsub.f32 %v1039, %v1103
      %v1168 = vsub.f32 %v1040, %v1104
      %v1169 = vsub.f32 %v1041, %v1105
      %v1170 = vsub.f32 %v1042, %v1106
      %v1171 = vsub.f32 %v1043, %v1107
      %v1172 = vsub.f32 %v1044, %v1108
      %v1173 = vsub.f32 %v1045, %v1109
      %v1174 = vsub.f32 %v1046, %v1110
      %v1175 = vsub.f32 %v1047, %v1111
      %v1176 = vsub.f32 %v1048, %v1112
      %v1177 = vsub.f32 %v1049, %v1113
      %v1178 = vsub.f32 %v1050, %v1114
      %v1179 = vmax.f32 %v1115, 0.0
      %v1180 = vmax.f32 %v1116, 0.0
      %v1181 = vmax.f32 %v1117, 0.0
      %v1182 = vmax.f32 %v1118, 0.0
      %v1183 = vmax.f32 %v1119, 0.0
      %v1184 = vmax.f32 %v1120, 0.0
      %v1185 = vmax.f32 %v1121, 0.0
      %v1186 = vmax.f32 %v1122, 0.0
      %v1187 = vmax.f32 %v1123, 0.0
      %v1188 = vmax.f32 %v1124, 0.0
      %v1189 = vmax.f32 %v1125, 0.0
      %v1190 = vmax.f32 %v1126, 0.0
      %v1191 = vmax.f32 %v1127, 0.0
      %v1192 = vmax.f32 %v1128, 0.0
      %v1193 = vmax.f32 %v1129, 0.0
      %v1194 = vmax.f32 %v1130, 0.0
      %v1195 = vmax.f32 %v1131, 0.0
      %v1196 = vmax.f32 %v1132, 0.0
      %v1197 = vmax.f32 %v1133, 0.0
      %v1198 = vmax.f32 %v1134, 0.0
      %v1199 = vmax.f32 %v1135, 0.0
      %v1200 = vmax.f32 %v1136, 0.0
      %v1201 = vmax.f32 %v1137, 0.0
      %v1202 = vmax.f32 %v1138, 0.0
      %v1203 = vmax.f32 %v1139, 0.0
      %v1204 = vmax.f32 %v1140, 0.0
      %v1205 = vmax.f32 %v1141, 0.0
      %v1206 = vmax.f32 %v1142, 0.0
      %v1207 = vmax.f32 %v1143, 0.0
      %v1208 = vmax.f32 %v1144, 0.0
      %v1209 = vmax.f32 %v1145, 0.0
      %v1210 = vmax.f32 %v1146, 0.0
      %v1211 = vmax.f32 %v1147, 0.0
      %v1212 = vmax.f32 %v1148, 0.0
      %v1213 = vmax.f32 %v1149, 0.0
      %v1214 = vmax.f32 %v1150, 0.0
      %v1215 = vmax.f32 %v1151, 0.0
      %v1216 = vmax.f32 %v1152, 0.0
      %v1217 = vmax.f32 %v1153, 0.0
      %v1218 = vmax.f32 %v1154, 0.0
      %v1219 = vmax.f32 %v1155, 0.0
      %v1220 = vmax.f32 %v1156, 0.0
      %v1221 = vmax.f32 %v1157, 0.0
      %v1222 = vmax.f32 %v1158, 0.0
      %v1223 = vmax.f32 %v1159, 0.0
      %v1224 = vmax.f32 %v1160, 0.0
      %v1225 = vmax.f32 %v1161, 0.0
      %v1226 = vmax.f32 %v1162, 0.0
      %v1227 = vmax.f32 %v1163, 0.0
      %v1228 = vmax.f32 %v1164, 0.0
      %v1229 = vmax.f32 %v1165, 0.0
      %v1230 = vmax.f32 %v1166, 0.0
      %v1231 = vmax.f32 %v1167, 0.0
      %v1232 = vmax.f32 %v1168, 0.0
      %v1233 = vmax.f32 %v1169, 0.0
      %v1234 = vmax.f32 %v1170, 0.0
      %v1235 = vmax.f32 %v1171, 0.0
      %v1236 = vmax.f32 %v1172, 0.0
      %v1237 = vmax.f32 %v1173, 0.0
      %v1238 = vmax.f32 %v1174, 0.0
      %v1239 = vmax.f32 %v1175, 0.0
      %v1240 = vmax.f32 %v1176, 0.0
      %v1241 = vmax.f32 %v1177, 0.0
      %v1242 = vmax.f32 %v1178, 0.0
      %v1243 = vrsqrt.pop %v1179
      %v1244 = vmul.f32 %v1179, %v1243
      %vm1245 = vcmp.eq.f32.partialorder %v1179, inf
      %v1246 = vsel %vm1245, %v1179, %v1244
      %vm1247 = vcmp.eq.f32.partialorder %v1179, 0.0
      %v1248 = vand.u32 %v1179, 2147483648
      %v1249 = vsel %vm1247, %v1248, %v1246
      %v1250 = vrsqrt.pop %v1180
      %v1251 = vmul.f32 %v1180, %v1250
      %vm1252 = vcmp.eq.f32.partialorder %v1180, inf
      %v1253 = vsel %vm1252, %v1180, %v1251
      %vm1254 = vcmp.eq.f32.partialorder %v1180, 0.0
      %v1255 = vand.u32 %v1180, 2147483648
      %v1256 = vsel %vm1254, %v1255, %v1253
      %v1257 = vrsqrt.pop %v1181
      %v1258 = vmul.f32 %v1181, %v1257
      %vm1259 = vcmp.eq.f32.partialorder %v1181, inf
      %v1260 = vsel %vm1259, %v1181, %v1258
      %vm1261 = vcmp.eq.f32.partialorder %v1181, 0.0
      %v1262 = vand.u32 %v1181, 2147483648
      %v1263 = vsel %vm1261, %v1262, %v1260
      %v1264 = vrsqrt.pop %v1182
      %v1265 = vmul.f32 %v1182, %v1264
      %vm1266 = vcmp.eq.f32.partialorder %v1182, inf
      %v1267 = vsel %vm1266, %v1182, %v1265
      %vm1268 = vcmp.eq.f32.partialorder %v1182, 0.0
      %v1269 = vand.u32 %v1182, 2147483648
      %v1270 = vsel %vm1268, %v1269, %v1267
      %v1271 = vrsqrt.pop %v1183
      %v1272 = vmul.f32 %v1183, %v1271
      %vm1273 = vcmp.eq.f32.partialorder %v1183, inf
      %v1274 = vsel %vm1273, %v1183, %v1272
      %vm1275 = vcmp.eq.f32.partialorder %v1183, 0.0
      %v1276 = vand.u32 %v1183, 2147483648
      %v1277 = vsel %vm1275, %v1276, %v1274
      %v1278 = vrsqrt.pop %v1184
      %v1279 = vmul.f32 %v1184, %v1278
      %vm1280 = vcmp.eq.f32.partialorder %v1184, inf
      %v1281 = vsel %vm1280, %v1184, %v1279
      %vm1282 = vcmp.eq.f32.partialorder %v1184, 0.0
      %v1283 = vand.u32 %v1184, 2147483648
      %v1284 = vsel %vm1282, %v1283, %v1281
      %v1285 = vrsqrt.pop %v1185
      %v1286 = vmul.f32 %v1185, %v1285
      %vm1287 = vcmp.eq.f32.partialorder %v1185, inf
      %v1288 = vsel %vm1287, %v1185, %v1286
      %vm1289 = vcmp.eq.f32.partialorder %v1185, 0.0
      %v1290 = vand.u32 %v1185, 2147483648
      %v1291 = vsel %vm1289, %v1290, %v1288
      %v1292 = vrsqrt.pop %v1186
      %v1293 = vmul.f32 %v1186, %v1292
      %vm1294 = vcmp.eq.f32.partialorder %v1186, inf
      %v1295 = vsel %vm1294, %v1186, %v1293
      %vm1296 = vcmp.eq.f32.partialorder %v1186, 0.0
      %v1297 = vand.u32 %v1186, 2147483648
      %v1298 = vsel %vm1296, %v1297, %v1295
      %v1299 = vrsqrt.pop %v1187
      %v1300 = vmul.f32 %v1187, %v1299
      %vm1301 = vcmp.eq.f32.partialorder %v1187, inf
      %v1302 = vsel %vm1301, %v1187, %v1300
      %vm1303 = vcmp.eq.f32.partialorder %v1187, 0.0
      %v1304 = vand.u32 %v1187, 2147483648
      %v1305 = vsel %vm1303, %v1304, %v1302
      %v1306 = vrsqrt.pop %v1188
      %v1307 = vmul.f32 %v1188, %v1306
      %vm1308 = vcmp.eq.f32.partialorder %v1188, inf
      %v1309 = vsel %vm1308, %v1188, %v1307
      %vm1310 = vcmp.eq.f32.partialorder %v1188, 0.0
      %v1311 = vand.u32 %v1188, 2147483648
      %v1312 = vsel %vm1310, %v1311, %v1309
      %v1313 = vrsqrt.pop %v1189
      %v1314 = vmul.f32 %v1189, %v1313
      %vm1315 = vcmp.eq.f32.partialorder %v1189, inf
      %v1316 = vsel %vm1315, %v1189, %v1314
      %vm1317 = vcmp.eq.f32.partialorder %v1189, 0.0
      %v1318 = vand.u32 %v1189, 2147483648
      %v1319 = vsel %vm1317, %v1318, %v1316
      %v1320 = vrsqrt.pop %v1190
      %v1321 = vmul.f32 %v1190, %v1320
      %vm1322 = vcmp.eq.f32.partialorder %v1190, inf
      %v1323 = vsel %vm1322, %v1190, %v1321
      %vm1324 = vcmp.eq.f32.partialorder %v1190, 0.0
      %v1325 = vand.u32 %v1190, 2147483648
      %v1326 = vsel %vm1324, %v1325, %v1323
      %v1327 = vrsqrt.pop %v1191
      %v1328 = vmul.f32 %v1191, %v1327
      %vm1329 = vcmp.eq.f32.partialorder %v1191, inf
      %v1330 = vsel %vm1329, %v1191, %v1328
      %vm1331 = vcmp.eq.f32.partialorder %v1191, 0.0
      %v1332 = vand.u32 %v1191, 2147483648
      %v1333 = vsel %vm1331, %v1332, %v1330
      %v1334 = vrsqrt.pop %v1192
      %v1335 = vmul.f32 %v1192, %v1334
      %vm1336 = vcmp.eq.f32.partialorder %v1192, inf
      %v1337 = vsel %vm1336, %v1192, %v1335
      %vm1338 = vcmp.eq.f32.partialorder %v1192, 0.0
      %v1339 = vand.u32 %v1192, 2147483648
      %v1340 = vsel %vm1338, %v1339, %v1337
      %v1341 = vrsqrt.pop %v1193
      %v1342 = vmul.f32 %v1193, %v1341
      %vm1343 = vcmp.eq.f32.partialorder %v1193, inf
      %v1344 = vsel %vm1343, %v1193, %v1342
      %vm1345 = vcmp.eq.f32.partialorder %v1193, 0.0
      %v1346 = vand.u32 %v1193, 2147483648
      %v1347 = vsel %vm1345, %v1346, %v1344
      %v1348 = vrsqrt.pop %v1194
      %v1349 = vmul.f32 %v1194, %v1348
      %vm1350 = vcmp.eq.f32.partialorder %v1194, inf
      %v1351 = vsel %vm1350, %v1194, %v1349
      %vm1352 = vcmp.eq.f32.partialorder %v1194, 0.0
      %v1353 = vand.u32 %v1194, 2147483648
      %v1354 = vsel %vm1352, %v1353, %v1351
      %v1355 = vrsqrt.pop %v1195
      %v1356 = vmul.f32 %v1195, %v1355
      %vm1357 = vcmp.eq.f32.partialorder %v1195, inf
      %v1358 = vsel %vm1357, %v1195, %v1356
      %vm1359 = vcmp.eq.f32.partialorder %v1195, 0.0
      %v1360 = vand.u32 %v1195, 2147483648
      %v1361 = vsel %vm1359, %v1360, %v1358
      %v1362 = vrsqrt.pop %v1196
      %v1363 = vmul.f32 %v1196, %v1362
      %vm1364 = vcmp.eq.f32.partialorder %v1196, inf
      %v1365 = vsel %vm1364, %v1196, %v1363
      %vm1366 = vcmp.eq.f32.partialorder %v1196, 0.0
      %v1367 = vand.u32 %v1196, 2147483648
      %v1368 = vsel %vm1366, %v1367, %v1365
      %v1369 = vrsqrt.pop %v1197
      %v1370 = vmul.f32 %v1197, %v1369
      %vm1371 = vcmp.eq.f32.partialorder %v1197, inf
      %v1372 = vsel %vm1371, %v1197, %v1370
      %vm1373 = vcmp.eq.f32.partialorder %v1197, 0.0
      %v1374 = vand.u32 %v1197, 2147483648
      %v1375 = vsel %vm1373, %v1374, %v1372
      %v1376 = vrsqrt.pop %v1198
      %v1377 = vmul.f32 %v1198, %v1376
      %vm1378 = vcmp.eq.f32.partialorder %v1198, inf
      %v1379 = vsel %vm1378, %v1198, %v1377
      %vm1380 = vcmp.eq.f32.partialorder %v1198, 0.0
      %v1381 = vand.u32 %v1198, 2147483648
      %v1382 = vsel %vm1380, %v1381, %v1379
      %v1383 = vrsqrt.pop %v1199
      %v1384 = vmul.f32 %v1199, %v1383
      %vm1385 = vcmp.eq.f32.partialorder %v1199, inf
      %v1386 = vsel %vm1385, %v1199, %v1384
      %vm1387 = vcmp.eq.f32.partialorder %v1199, 0.0
      %v1388 = vand.u32 %v1199, 2147483648
      %v1389 = vsel %vm1387, %v1388, %v1386
      %v1390 = vrsqrt.pop %v1200
      %v1391 = vmul.f32 %v1200, %v1390
      %vm1392 = vcmp.eq.f32.partialorder %v1200, inf
      %v1393 = vsel %vm1392, %v1200, %v1391
      %vm1394 = vcmp.eq.f32.partialorder %v1200, 0.0
      %v1395 = vand.u32 %v1200, 2147483648
      %v1396 = vsel %vm1394, %v1395, %v1393
      %v1397 = vrsqrt.pop %v1201
      %v1398 = vmul.f32 %v1201, %v1397
      %vm1399 = vcmp.eq.f32.partialorder %v1201, inf
      %v1400 = vsel %vm1399, %v1201, %v1398
      %vm1401 = vcmp.eq.f32.partialorder %v1201, 0.0
      %v1402 = vand.u32 %v1201, 2147483648
      %v1403 = vsel %vm1401, %v1402, %v1400
      %v1404 = vrsqrt.pop %v1202
      %v1405 = vmul.f32 %v1202, %v1404
      %vm1406 = vcmp.eq.f32.partialorder %v1202, inf
      %v1407 = vsel %vm1406, %v1202, %v1405
      %vm1408 = vcmp.eq.f32.partialorder %v1202, 0.0
      %v1409 = vand.u32 %v1202, 2147483648
      %v1410 = vsel %vm1408, %v1409, %v1407
      %v1411 = vrsqrt.pop %v1203
      %v1412 = vmul.f32 %v1203, %v1411
      %vm1413 = vcmp.eq.f32.partialorder %v1203, inf
      %v1414 = vsel %vm1413, %v1203, %v1412
      %vm1415 = vcmp.eq.f32.partialorder %v1203, 0.0
      %v1416 = vand.u32 %v1203, 2147483648
      %v1417 = vsel %vm1415, %v1416, %v1414
      %v1418 = vrsqrt.pop %v1204
      %v1419 = vmul.f32 %v1204, %v1418
      %vm1420 = vcmp.eq.f32.partialorder %v1204, inf
      %v1421 = vsel %vm1420, %v1204, %v1419
      %vm1422 = vcmp.eq.f32.partialorder %v1204, 0.0
      %v1423 = vand.u32 %v1204, 2147483648
      %v1424 = vsel %vm1422, %v1423, %v1421
      %v1425 = vrsqrt.pop %v1205
      %v1426 = vmul.f32 %v1205, %v1425
      %vm1427 = vcmp.eq.f32.partialorder %v1205, inf
      %v1428 = vsel %vm1427, %v1205, %v1426
      %vm1429 = vcmp.eq.f32.partialorder %v1205, 0.0
      %v1430 = vand.u32 %v1205, 2147483648
      %v1431 = vsel %vm1429, %v1430, %v1428
      %v1432 = vrsqrt.pop %v1206
      %v1433 = vmul.f32 %v1206, %v1432
      %vm1434 = vcmp.eq.f32.partialorder %v1206, inf
      %v1435 = vsel %vm1434, %v1206, %v1433
      %vm1436 = vcmp.eq.f32.partialorder %v1206, 0.0
      %v1437 = vand.u32 %v1206, 2147483648
      %v1438 = vsel %vm1436, %v1437, %v1435
      %v1439 = vrsqrt.pop %v1207
      %v1440 = vmul.f32 %v1207, %v1439
      %vm1441 = vcmp.eq.f32.partialorder %v1207, inf
      %v1442 = vsel %vm1441, %v1207, %v1440
      %vm1443 = vcmp.eq.f32.partialorder %v1207, 0.0
      %v1444 = vand.u32 %v1207, 2147483648
      %v1445 = vsel %vm1443, %v1444, %v1442
      %v1446 = vrsqrt.pop %v1208
      %v1447 = vmul.f32 %v1208, %v1446
      %vm1448 = vcmp.eq.f32.partialorder %v1208, inf
      %v1449 = vsel %vm1448, %v1208, %v1447
      %vm1450 = vcmp.eq.f32.partialorder %v1208, 0.0
      %v1451 = vand.u32 %v1208, 2147483648
      %v1452 = vsel %vm1450, %v1451, %v1449
      %v1453 = vrsqrt.pop %v1209
      %v1454 = vmul.f32 %v1209, %v1453
      %vm1455 = vcmp.eq.f32.partialorder %v1209, inf
      %v1456 = vsel %vm1455, %v1209, %v1454
      %vm1457 = vcmp.eq.f32.partialorder %v1209, 0.0
      %v1458 = vand.u32 %v1209, 2147483648
      %v1459 = vsel %vm1457, %v1458, %v1456
      %v1460 = vrsqrt.pop %v1210
      %v1461 = vmul.f32 %v1210, %v1460
      %vm1462 = vcmp.eq.f32.partialorder %v1210, inf
      %v1463 = vsel %vm1462, %v1210, %v1461
      %vm1464 = vcmp.eq.f32.partialorder %v1210, 0.0
      %v1465 = vand.u32 %v1210, 2147483648
      %v1466 = vsel %vm1464, %v1465, %v1463
      %v1467 = vrsqrt.pop %v1211
      %v1468 = vmul.f32 %v1211, %v1467
      %vm1469 = vcmp.eq.f32.partialorder %v1211, inf
      %v1470 = vsel %vm1469, %v1211, %v1468
      %vm1471 = vcmp.eq.f32.partialorder %v1211, 0.0
      %v1472 = vand.u32 %v1211, 2147483648
      %v1473 = vsel %vm1471, %v1472, %v1470
      %v1474 = vrsqrt.pop %v1212
      %v1475 = vmul.f32 %v1212, %v1474
      %vm1476 = vcmp.eq.f32.partialorder %v1212, inf
      %v1477 = vsel %vm1476, %v1212, %v1475
      %vm1478 = vcmp.eq.f32.partialorder %v1212, 0.0
      %v1479 = vand.u32 %v1212, 2147483648
      %v1480 = vsel %vm1478, %v1479, %v1477
      %v1481 = vrsqrt.pop %v1213
      %v1482 = vmul.f32 %v1213, %v1481
      %vm1483 = vcmp.eq.f32.partialorder %v1213, inf
      %v1484 = vsel %vm1483, %v1213, %v1482
      %vm1485 = vcmp.eq.f32.partialorder %v1213, 0.0
      %v1486 = vand.u32 %v1213, 2147483648
      %v1487 = vsel %vm1485, %v1486, %v1484
      %v1488 = vrsqrt.pop %v1214
      %v1489 = vmul.f32 %v1214, %v1488
      %vm1490 = vcmp.eq.f32.partialorder %v1214, inf
      %v1491 = vsel %vm1490, %v1214, %v1489
      %vm1492 = vcmp.eq.f32.partialorder %v1214, 0.0
      %v1493 = vand.u32 %v1214, 2147483648
      %v1494 = vsel %vm1492, %v1493, %v1491
      %v1495 = vrsqrt.pop %v1215
      %v1496 = vmul.f32 %v1215, %v1495
      %vm1497 = vcmp.eq.f32.partialorder %v1215, inf
      %v1498 = vsel %vm1497, %v1215, %v1496
      %vm1499 = vcmp.eq.f32.partialorder %v1215, 0.0
      %v1500 = vand.u32 %v1215, 2147483648
      %v1501 = vsel %vm1499, %v1500, %v1498
      %v1502 = vrsqrt.pop %v1216
      %v1503 = vmul.f32 %v1216, %v1502
      %vm1504 = vcmp.eq.f32.partialorder %v1216, inf
      %v1505 = vsel %vm1504, %v1216, %v1503
      %vm1506 = vcmp.eq.f32.partialorder %v1216, 0.0
      %v1507 = vand.u32 %v1216, 2147483648
      %v1508 = vsel %vm1506, %v1507, %v1505
      %v1509 = vrsqrt.pop %v1217
      %v1510 = vmul.f32 %v1217, %v1509
      %vm1511 = vcmp.eq.f32.partialorder %v1217, inf
      %v1512 = vsel %vm1511, %v1217, %v1510
      %vm1513 = vcmp.eq.f32.partialorder %v1217, 0.0
      %v1514 = vand.u32 %v1217, 2147483648
      %v1515 = vsel %vm1513, %v1514, %v1512
      %v1516 = vrsqrt.pop %v1218
      %v1517 = vmul.f32 %v1218, %v1516
      %vm1518 = vcmp.eq.f32.partialorder %v1218, inf
      %v1519 = vsel %vm1518, %v1218, %v1517
      %vm1520 = vcmp.eq.f32.partialorder %v1218, 0.0
      %v1521 = vand.u32 %v1218, 2147483648
      %v1522 = vsel %vm1520, %v1521, %v1519
      %v1523 = vrsqrt.pop %v1219
      %v1524 = vmul.f32 %v1219, %v1523
      %vm1525 = vcmp.eq.f32.partialorder %v1219, inf
      %v1526 = vsel %vm1525, %v1219, %v1524
      %vm1527 = vcmp.eq.f32.partialorder %v1219, 0.0
      %v1528 = vand.u32 %v1219, 2147483648
      %v1529 = vsel %vm1527, %v1528, %v1526
      %v1530 = vrsqrt.pop %v1220
      %v1531 = vmul.f32 %v1220, %v1530
      %vm1532 = vcmp.eq.f32.partialorder %v1220, inf
      %v1533 = vsel %vm1532, %v1220, %v1531
      %vm1534 = vcmp.eq.f32.partialorder %v1220, 0.0
      %v1535 = vand.u32 %v1220, 2147483648
      %v1536 = vsel %vm1534, %v1535, %v1533
      %v1537 = vrsqrt.pop %v1221
      %v1538 = vmul.f32 %v1221, %v1537
      %vm1539 = vcmp.eq.f32.partialorder %v1221, inf
      %v1540 = vsel %vm1539, %v1221, %v1538
      %vm1541 = vcmp.eq.f32.partialorder %v1221, 0.0
      %v1542 = vand.u32 %v1221, 2147483648
      %v1543 = vsel %vm1541, %v1542, %v1540
      %v1544 = vrsqrt.pop %v1222
      %v1545 = vmul.f32 %v1222, %v1544
      %vm1546 = vcmp.eq.f32.partialorder %v1222, inf
      %v1547 = vsel %vm1546, %v1222, %v1545
      %vm1548 = vcmp.eq.f32.partialorder %v1222, 0.0
      %v1549 = vand.u32 %v1222, 2147483648
      %v1550 = vsel %vm1548, %v1549, %v1547
      %v1551 = vrsqrt.pop %v1223
      %v1552 = vmul.f32 %v1223, %v1551
      %vm1553 = vcmp.eq.f32.partialorder %v1223, inf
      %v1554 = vsel %vm1553, %v1223, %v1552
      %vm1555 = vcmp.eq.f32.partialorder %v1223, 0.0
      %v1556 = vand.u32 %v1223, 2147483648
      %v1557 = vsel %vm1555, %v1556, %v1554
      %v1558 = vrsqrt.pop %v1224
      %v1559 = vmul.f32 %v1224, %v1558
      %vm1560 = vcmp.eq.f32.partialorder %v1224, inf
      %v1561 = vsel %vm1560, %v1224, %v1559
      %vm1562 = vcmp.eq.f32.partialorder %v1224, 0.0
      %v1563 = vand.u32 %v1224, 2147483648
      %v1564 = vsel %vm1562, %v1563, %v1561
      %v1565 = vrsqrt.pop %v1225
      %v1566 = vmul.f32 %v1225, %v1565
      %vm1567 = vcmp.eq.f32.partialorder %v1225, inf
      %v1568 = vsel %vm1567, %v1225, %v1566
      %vm1569 = vcmp.eq.f32.partialorder %v1225, 0.0
      %v1570 = vand.u32 %v1225, 2147483648
      %v1571 = vsel %vm1569, %v1570, %v1568
      %v1572 = vrsqrt.pop %v1226
      %v1573 = vmul.f32 %v1226, %v1572
      %vm1574 = vcmp.eq.f32.partialorder %v1226, inf
      %v1575 = vsel %vm1574, %v1226, %v1573
      %vm1576 = vcmp.eq.f32.partialorder %v1226, 0.0
      %v1577 = vand.u32 %v1226, 2147483648
      %v1578 = vsel %vm1576, %v1577, %v1575
      %v1579 = vrsqrt.pop %v1227
      %v1580 = vmul.f32 %v1227, %v1579
      %vm1581 = vcmp.eq.f32.partialorder %v1227, inf
      %v1582 = vsel %vm1581, %v1227, %v1580
      %vm1583 = vcmp.eq.f32.partialorder %v1227, 0.0
      %v1584 = vand.u32 %v1227, 2147483648
      %v1585 = vsel %vm1583, %v1584, %v1582
      %v1586 = vrsqrt.pop %v1228
      %v1587 = vmul.f32 %v1228, %v1586
      %vm1588 = vcmp.eq.f32.partialorder %v1228, inf
      %v1589 = vsel %vm1588, %v1228, %v1587
      %vm1590 = vcmp.eq.f32.partialorder %v1228, 0.0
      %v1591 = vand.u32 %v1228, 2147483648
      %v1592 = vsel %vm1590, %v1591, %v1589
      %v1593 = vrsqrt.pop %v1229
      %v1594 = vmul.f32 %v1229, %v1593
      %vm1595 = vcmp.eq.f32.partialorder %v1229, inf
      %v1596 = vsel %vm1595, %v1229, %v1594
      %vm1597 = vcmp.eq.f32.partialorder %v1229, 0.0
      %v1598 = vand.u32 %v1229, 2147483648
      %v1599 = vsel %vm1597, %v1598, %v1596
      %v1600 = vrsqrt.pop %v1230
      %v1601 = vmul.f32 %v1230, %v1600
      %vm1602 = vcmp.eq.f32.partialorder %v1230, inf
      %v1603 = vsel %vm1602, %v1230, %v1601
      %vm1604 = vcmp.eq.f32.partialorder %v1230, 0.0
      %v1605 = vand.u32 %v1230, 2147483648
      %v1606 = vsel %vm1604, %v1605, %v1603
      %v1607 = vrsqrt.pop %v1231
      %v1608 = vmul.f32 %v1231, %v1607
      %vm1609 = vcmp.eq.f32.partialorder %v1231, inf
      %v1610 = vsel %vm1609, %v1231, %v1608
      %vm1611 = vcmp.eq.f32.partialorder %v1231, 0.0
      %v1612 = vand.u32 %v1231, 2147483648
      %v1613 = vsel %vm1611, %v1612, %v1610
      %v1614 = vrsqrt.pop %v1232
      %v1615 = vmul.f32 %v1232, %v1614
      %vm1616 = vcmp.eq.f32.partialorder %v1232, inf
      %v1617 = vsel %vm1616, %v1232, %v1615
      %vm1618 = vcmp.eq.f32.partialorder %v1232, 0.0
      %v1619 = vand.u32 %v1232, 2147483648
      %v1620 = vsel %vm1618, %v1619, %v1617
      %v1621 = vrsqrt.pop %v1233
      %v1622 = vmul.f32 %v1233, %v1621
      %vm1623 = vcmp.eq.f32.partialorder %v1233, inf
      %v1624 = vsel %vm1623, %v1233, %v1622
      %vm1625 = vcmp.eq.f32.partialorder %v1233, 0.0
      %v1626 = vand.u32 %v1233, 2147483648
      %v1627 = vsel %vm1625, %v1626, %v1624
      %v1628 = vrsqrt.pop %v1234
      %v1629 = vmul.f32 %v1234, %v1628
      %vm1630 = vcmp.eq.f32.partialorder %v1234, inf
      %v1631 = vsel %vm1630, %v1234, %v1629
      %vm1632 = vcmp.eq.f32.partialorder %v1234, 0.0
      %v1633 = vand.u32 %v1234, 2147483648
      %v1634 = vsel %vm1632, %v1633, %v1631
      %v1635 = vrsqrt.pop %v1235
      %v1636 = vmul.f32 %v1235, %v1635
      %vm1637 = vcmp.eq.f32.partialorder %v1235, inf
      %v1638 = vsel %vm1637, %v1235, %v1636
      %vm1639 = vcmp.eq.f32.partialorder %v1235, 0.0
      %v1640 = vand.u32 %v1235, 2147483648
      %v1641 = vsel %vm1639, %v1640, %v1638
      %v1642 = vrsqrt.pop %v1236
      %v1643 = vmul.f32 %v1236, %v1642
      %vm1644 = vcmp.eq.f32.partialorder %v1236, inf
      %v1645 = vsel %vm1644, %v1236, %v1643
      %vm1646 = vcmp.eq.f32.partialorder %v1236, 0.0
      %v1647 = vand.u32 %v1236, 2147483648
      %v1648 = vsel %vm1646, %v1647, %v1645
      %v1649 = vrsqrt.pop %v1237
      %v1650 = vmul.f32 %v1237, %v1649
      %vm1651 = vcmp.eq.f32.partialorder %v1237, inf
      %v1652 = vsel %vm1651, %v1237, %v1650
      %vm1653 = vcmp.eq.f32.partialorder %v1237, 0.0
      %v1654 = vand.u32 %v1237, 2147483648
      %v1655 = vsel %vm1653, %v1654, %v1652
      %v1656 = vrsqrt.pop %v1238
      %v1657 = vmul.f32 %v1238, %v1656
      %vm1658 = vcmp.eq.f32.partialorder %v1238, inf
      %v1659 = vsel %vm1658, %v1238, %v1657
      %vm1660 = vcmp.eq.f32.partialorder %v1238, 0.0
      %v1661 = vand.u32 %v1238, 2147483648
      %v1662 = vsel %vm1660, %v1661, %v1659
      %v1663 = vrsqrt.pop %v1239
      %v1664 = vmul.f32 %v1239, %v1663
      %vm1665 = vcmp.eq.f32.partialorder %v1239, inf
      %v1666 = vsel %vm1665, %v1239, %v1664
      %vm1667 = vcmp.eq.f32.partialorder %v1239, 0.0
      %v1668 = vand.u32 %v1239, 2147483648
      %v1669 = vsel %vm1667, %v1668, %v1666
      %v1670 = vrsqrt.pop %v1240
      %v1671 = vmul.f32 %v1240, %v1670
      %vm1672 = vcmp.eq.f32.partialorder %v1240, inf
      %v1673 = vsel %vm1672, %v1240, %v1671
      %vm1674 = vcmp.eq.f32.partialorder %v1240, 0.0
      %v1675 = vand.u32 %v1240, 2147483648
      %v1676 = vsel %vm1674, %v1675, %v1673
      %v1677 = vrsqrt.pop %v1241
      %v1678 = vmul.f32 %v1241, %v1677
      %vm1679 = vcmp.eq.f32.partialorder %v1241, inf
      %v1680 = vsel %vm1679, %v1241, %v1678
      %vm1681 = vcmp.eq.f32.partialorder %v1241, 0.0
      %v1682 = vand.u32 %v1241, 2147483648
      %v1683 = vsel %vm1681, %v1682, %v1680
      %v1684 = vrsqrt.pop %v1242
      %v1685 = vmul.f32 %v1242, %v1684
      %vm1686 = vcmp.eq.f32.partialorder %v1242, inf
      %v1687 = vsel %vm1686, %v1242, %v1685
      %vm1688 = vcmp.eq.f32.partialorder %v1242, 0.0
      %v1689 = vand.u32 %v1242, 2147483648
      %v1690 = vsel %vm1688, %v1689, %v1687
      %v1691 = vmul.f32 %v1249, -0.17677669
      %v1692 = vmul.f32 %v1256, -0.17677669
      %v1693 = vmul.f32 %v1263, -0.17677669
      %v1694 = vmul.f32 %v1270, -0.17677669
      %v1695 = vmul.f32 %v1277, -0.17677669
      %v1696 = vmul.f32 %v1284, -0.17677669
      %v1697 = vmul.f32 %v1291, -0.17677669
      %v1698 = vmul.f32 %v1298, -0.17677669
      %v1699 = vmul.f32 %v1305, -0.17677669
      %v1700 = vmul.f32 %v1312, -0.17677669
      %v1701 = vmul.f32 %v1319, -0.17677669
      %v1702 = vmul.f32 %v1326, -0.17677669
      %v1703 = vmul.f32 %v1333, -0.17677669
      %v1704 = vmul.f32 %v1340, -0.17677669
      %v1705 = vmul.f32 %v1347, -0.17677669
      %v1706 = vmul.f32 %v1354, -0.17677669
      %v1707 = vmul.f32 %v1361, -0.17677669
      %v1708 = vmul.f32 %v1368, -0.17677669
      %v1709 = vmul.f32 %v1375, -0.17677669
      %v1710 = vmul.f32 %v1382, -0.17677669
      %v1711 = vmul.f32 %v1389, -0.17677669
      %v1712 = vmul.f32 %v1396, -0.17677669
      %v1713 = vmul.f32 %v1403, -0.17677669
      %v1714 = vmul.f32 %v1410, -0.17677669
      %v1715 = vmul.f32 %v1417, -0.17677669
      %v1716 = vmul.f32 %v1424, -0.17677669
      %v1717 = vmul.f32 %v1431, -0.17677669
      %v1718 = vmul.f32 %v1438, -0.17677669
      %v1719 = vmul.f32 %v1445, -0.17677669
      %v1720 = vmul.f32 %v1452, -0.17677669
      %v1721 = vmul.f32 %v1459, -0.17677669
      %v1722 = vmul.f32 %v1466, -0.17677669
      %v1723 = vmul.f32 %v1473, -0.17677669
      %v1724 = vmul.f32 %v1480, -0.17677669
      %v1725 = vmul.f32 %v1487, -0.17677669
      %v1726 = vmul.f32 %v1494, -0.17677669
      %v1727 = vmul.f32 %v1501, -0.17677669
      %v1728 = vmul.f32 %v1508, -0.17677669
      %v1729 = vmul.f32 %v1515, -0.17677669
      %v1730 = vmul.f32 %v1522, -0.17677669
      %v1731 = vmul.f32 %v1529, -0.17677669
      %v1732 = vmul.f32 %v1536, -0.17677669
      %v1733 = vmul.f32 %v1543, -0.17677669
      %v1734 = vmul.f32 %v1550, -0.17677669
      %v1735 = vmul.f32 %v1557, -0.17677669
      %v1736 = vmul.f32 %v1564, -0.17677669
      %v1737 = vmul.f32 %v1571, -0.17677669
      %v1738 = vmul.f32 %v1578, -0.17677669
      %v1739 = vmul.f32 %v1585, -0.17677669
      %v1740 = vmul.f32 %v1592, -0.17677669
      %v1741 = vmul.f32 %v1599, -0.17677669
      %v1742 = vmul.f32 %v1606, -0.17677669
      %v1743 = vmul.f32 %v1613, -0.17677669
      %v1744 = vmul.f32 %v1620, -0.17677669
      %v1745 = vmul.f32 %v1627, -0.17677669
      %v1746 = vmul.f32 %v1634, -0.17677669
      %v1747 = vmul.f32 %v1641, -0.17677669
      %v1748 = vmul.f32 %v1648, -0.17677669
      %v1749 = vmul.f32 %v1655, -0.17677669
      %v1750 = vmul.f32 %v1662, -0.17677669
      %v1751 = vmul.f32 %v1669, -0.17677669
      %v1752 = vmul.f32 %v1676, -0.17677669
      %v1753 = vmul.f32 %v1683, -0.17677669
      %v1754 = vmul.f32 %v1690, -0.17677669
      %v1755 = vmax.f32 %v1691, %v1692
      %1756 = vmax.xlane.f32.xlu0 %v1755
      %v1757 = vpop.xlane.xlu0 %1756
      %v1758 = vmax.f32 %v1693, %v1694
      %1759 = vmax.xlane.f32.xlu0 %v1758
      %v1760 = vpop.xlane.xlu0 %1759
      %v1761 = vmax.f32 %v1695, %v1696
      %1762 = vmax.xlane.f32.xlu0 %v1761
      %v1763 = vpop.xlane.xlu0 %1762
      %v1764 = vmax.f32 %v1697, %v1698
      %1765 = vmax.xlane.f32.xlu0 %v1764
      %v1766 = vpop.xlane.xlu0 %1765
      %v1767 = vmax.f32 %v1699, %v1700
      %1768 = vmax.xlane.f32.xlu0 %v1767
      %v1769 = vpop.xlane.xlu0 %1768
      %v1770 = vmax.f32 %v1701, %v1702
      %1771 = vmax.xlane.f32.xlu0 %v1770
      %v1772 = vpop.xlane.xlu0 %1771
      %v1773 = vmax.f32 %v1703, %v1704
      %1774 = vmax.xlane.f32.xlu0 %v1773
      %v1775 = vpop.xlane.xlu0 %1774
      %v1776 = vmax.f32 %v1705, %v1706
      %1777 = vmax.xlane.f32.xlu0 %v1776
      %v1778 = vpop.xlane.xlu0 %1777
      %v1779 = vmax.f32 %v1707, %v1708
      %1780 = vmax.xlane.f32.xlu0 %v1779
      %v1781 = vpop.xlane.xlu0 %1780
      %v1782 = vmax.f32 %v1709, %v1710
      %1783 = vmax.xlane.f32.xlu0 %v1782
      %v1784 = vpop.xlane.xlu0 %1783
      %v1785 = vmax.f32 %v1711, %v1712
      %1786 = vmax.xlane.f32.xlu0 %v1785
      %v1787 = vpop.xlane.xlu0 %1786
      %v1788 = vmax.f32 %v1713, %v1714
      %1789 = vmax.xlane.f32.xlu0 %v1788
      %v1790 = vpop.xlane.xlu0 %1789
      %v1791 = vmax.f32 %v1715, %v1716
      %1792 = vmax.xlane.f32.xlu0 %v1791
      %v1793 = vpop.xlane.xlu0 %1792
      %v1794 = vmax.f32 %v1717, %v1718
      %1795 = vmax.xlane.f32.xlu0 %v1794
      %v1796 = vpop.xlane.xlu0 %1795
      %v1797 = vmax.f32 %v1719, %v1720
      %1798 = vmax.xlane.f32.xlu0 %v1797
      %v1799 = vpop.xlane.xlu0 %1798
      %v1800 = vmax.f32 %v1721, %v1722
      %1801 = vmax.xlane.f32.xlu0 %v1800
      %v1802 = vpop.xlane.xlu0 %1801
      %v1803 = vmax.f32 %v1723, %v1724
      %1804 = vmax.xlane.f32.xlu0 %v1803
      %v1805 = vpop.xlane.xlu0 %1804
      %v1806 = vmax.f32 %v1725, %v1726
      %1807 = vmax.xlane.f32.xlu0 %v1806
      %v1808 = vpop.xlane.xlu0 %1807
      %v1809 = vmax.f32 %v1727, %v1728
      %1810 = vmax.xlane.f32.xlu0 %v1809
      %v1811 = vpop.xlane.xlu0 %1810
      %v1812 = vmax.f32 %v1729, %v1730
      %1813 = vmax.xlane.f32.xlu0 %v1812
      %v1814 = vpop.xlane.xlu0 %1813
      %v1815 = vmax.f32 %v1731, %v1732
      %1816 = vmax.xlane.f32.xlu0 %v1815
      %v1817 = vpop.xlane.xlu0 %1816
      %v1818 = vmax.f32 %v1733, %v1734
      %1819 = vmax.xlane.f32.xlu0 %v1818
      %v1820 = vpop.xlane.xlu0 %1819
      %v1821 = vmax.f32 %v1735, %v1736
      %1822 = vmax.xlane.f32.xlu0 %v1821
      %v1823 = vpop.xlane.xlu0 %1822
      %v1824 = vmax.f32 %v1737, %v1738
      %1825 = vmax.xlane.f32.xlu0 %v1824
      %v1826 = vpop.xlane.xlu0 %1825
      %v1827 = vmax.f32 %v1739, %v1740
      %1828 = vmax.xlane.f32.xlu0 %v1827
      %v1829 = vpop.xlane.xlu0 %1828
      %v1830 = vmax.f32 %v1741, %v1742
      %1831 = vmax.xlane.f32.xlu0 %v1830
      %v1832 = vpop.xlane.xlu0 %1831
      %v1833 = vmax.f32 %v1743, %v1744
      %1834 = vmax.xlane.f32.xlu0 %v1833
      %v1835 = vpop.xlane.xlu0 %1834
      %v1836 = vmax.f32 %v1745, %v1746
      %1837 = vmax.xlane.f32.xlu0 %v1836
      %v1838 = vpop.xlane.xlu0 %1837
      %v1839 = vmax.f32 %v1747, %v1748
      %1840 = vmax.xlane.f32.xlu0 %v1839
      %v1841 = vpop.xlane.xlu0 %1840
      %v1842 = vmax.f32 %v1749, %v1750
      %1843 = vmax.xlane.f32.xlu0 %v1842
      %v1844 = vpop.xlane.xlu0 %1843
      %v1845 = vmax.f32 %v1751, %v1752
      %1846 = vmax.xlane.f32.xlu0 %v1845
      %v1847 = vpop.xlane.xlu0 %1846
      %v1848 = vmax.f32 %v1753, %v1754
      %1849 = vmax.xlane.f32.xlu0 %v1848
      %v1850 = vpop.xlane.xlu0 %1849
      %v1851 = vsub.f32 %v1691, %v1757
      %v1852 = vsub.f32 %v1692, %v1757
      %v1853 = vsub.f32 %v1693, %v1760
      %v1854 = vsub.f32 %v1694, %v1760
      %v1855 = vsub.f32 %v1695, %v1763
      %v1856 = vsub.f32 %v1696, %v1763
      %v1857 = vsub.f32 %v1697, %v1766
      %v1858 = vsub.f32 %v1698, %v1766
      %v1859 = vsub.f32 %v1699, %v1769
      %v1860 = vsub.f32 %v1700, %v1769
      %v1861 = vsub.f32 %v1701, %v1772
      %v1862 = vsub.f32 %v1702, %v1772
      %v1863 = vsub.f32 %v1703, %v1775
      %v1864 = vsub.f32 %v1704, %v1775
      %v1865 = vsub.f32 %v1705, %v1778
      %v1866 = vsub.f32 %v1706, %v1778
      %v1867 = vsub.f32 %v1707, %v1781
      %v1868 = vsub.f32 %v1708, %v1781
      %v1869 = vsub.f32 %v1709, %v1784
      %v1870 = vsub.f32 %v1710, %v1784
      %v1871 = vsub.f32 %v1711, %v1787
      %v1872 = vsub.f32 %v1712, %v1787
      %v1873 = vsub.f32 %v1713, %v1790
      %v1874 = vsub.f32 %v1714, %v1790
      %v1875 = vsub.f32 %v1715, %v1793
      %v1876 = vsub.f32 %v1716, %v1793
      %v1877 = vsub.f32 %v1717, %v1796
      %v1878 = vsub.f32 %v1718, %v1796
      %v1879 = vsub.f32 %v1719, %v1799
      %v1880 = vsub.f32 %v1720, %v1799
      %v1881 = vsub.f32 %v1721, %v1802
      %v1882 = vsub.f32 %v1722, %v1802
      %v1883 = vsub.f32 %v1723, %v1805
      %v1884 = vsub.f32 %v1724, %v1805
      %v1885 = vsub.f32 %v1725, %v1808
      %v1886 = vsub.f32 %v1726, %v1808
      %v1887 = vsub.f32 %v1727, %v1811
      %v1888 = vsub.f32 %v1728, %v1811
      %v1889 = vsub.f32 %v1729, %v1814
      %v1890 = vsub.f32 %v1730, %v1814
      %v1891 = vsub.f32 %v1731, %v1817
      %v1892 = vsub.f32 %v1732, %v1817
      %v1893 = vsub.f32 %v1733, %v1820
      %v1894 = vsub.f32 %v1734, %v1820
      %v1895 = vsub.f32 %v1735, %v1823
      %v1896 = vsub.f32 %v1736, %v1823
      %v1897 = vsub.f32 %v1737, %v1826
      %v1898 = vsub.f32 %v1738, %v1826
      %v1899 = vsub.f32 %v1739, %v1829
      %v1900 = vsub.f32 %v1740, %v1829
      %v1901 = vsub.f32 %v1741, %v1832
      %v1902 = vsub.f32 %v1742, %v1832
      %v1903 = vsub.f32 %v1743, %v1835
      %v1904 = vsub.f32 %v1744, %v1835
      %v1905 = vsub.f32 %v1745, %v1838
      %v1906 = vsub.f32 %v1746, %v1838
      %v1907 = vsub.f32 %v1747, %v1841
      %v1908 = vsub.f32 %v1748, %v1841
      %v1909 = vsub.f32 %v1749, %v1844
      %v1910 = vsub.f32 %v1750, %v1844
      %v1911 = vsub.f32 %v1751, %v1847
      %v1912 = vsub.f32 %v1752, %v1847
      %v1913 = vsub.f32 %v1753, %v1850
      %v1914 = vsub.f32 %v1754, %v1850
      %v1915 = vmul.f32 %v1851, 1.442695
      %v1916 = vpow.pop %v1915
      %v1917 = vmul.f32 %v1852, 1.442695
      %v1918 = vpow.pop %v1917
      %v1919 = vmul.f32 %v1853, 1.442695
      %v1920 = vpow.pop %v1919
      %v1921 = vmul.f32 %v1854, 1.442695
      %v1922 = vpow.pop %v1921
      %v1923 = vmul.f32 %v1855, 1.442695
      %v1924 = vpow.pop %v1923
      %v1925 = vmul.f32 %v1856, 1.442695
      %v1926 = vpow.pop %v1925
      %v1927 = vmul.f32 %v1857, 1.442695
      %v1928 = vpow.pop %v1927
      %v1929 = vmul.f32 %v1858, 1.442695
      %v1930 = vpow.pop %v1929
      %v1931 = vmul.f32 %v1859, 1.442695
      %v1932 = vpow.pop %v1931
      %v1933 = vmul.f32 %v1860, 1.442695
      %v1934 = vpow.pop %v1933
      %v1935 = vmul.f32 %v1861, 1.442695
      %v1936 = vpow.pop %v1935
      %v1937 = vmul.f32 %v1862, 1.442695
      %v1938 = vpow.pop %v1937
      %v1939 = vmul.f32 %v1863, 1.442695
      %v1940 = vpow.pop %v1939
      %v1941 = vmul.f32 %v1864, 1.442695
      %v1942 = vpow.pop %v1941
      %v1943 = vmul.f32 %v1865, 1.442695
      %v1944 = vpow.pop %v1943
      %v1945 = vmul.f32 %v1866, 1.442695
      %v1946 = vpow.pop %v1945
      %v1947 = vmul.f32 %v1867, 1.442695
      %v1948 = vpow.pop %v1947
      %v1949 = vmul.f32 %v1868, 1.442695
      %v1950 = vpow.pop %v1949
      %v1951 = vmul.f32 %v1869, 1.442695
      %v1952 = vpow.pop %v1951
      %v1953 = vmul.f32 %v1870, 1.442695
      %v1954 = vpow.pop %v1953
      %v1955 = vmul.f32 %v1871, 1.442695
      %v1956 = vpow.pop %v1955
      %v1957 = vmul.f32 %v1872, 1.442695
      %v1958 = vpow.pop %v1957
      %v1959 = vmul.f32 %v1873, 1.442695
      %v1960 = vpow.pop %v1959
      %v1961 = vmul.f32 %v1874, 1.442695
      %v1962 = vpow.pop %v1961
      %v1963 = vmul.f32 %v1875, 1.442695
      %v1964 = vpow.pop %v1963
      %v1965 = vmul.f32 %v1876, 1.442695
      %v1966 = vpow.pop %v1965
      %v1967 = vmul.f32 %v1877, 1.442695
      %v1968 = vpow.pop %v1967
      %v1969 = vmul.f32 %v1878, 1.442695
      %v1970 = vpow.pop %v1969
      %v1971 = vmul.f32 %v1879, 1.442695
      %v1972 = vpow.pop %v1971
      %v1973 = vmul.f32 %v1880, 1.442695
      %v1974 = vpow.pop %v1973
      %v1975 = vmul.f32 %v1881, 1.442695
      %v1976 = vpow.pop %v1975
      %v1977 = vmul.f32 %v1882, 1.442695
      %v1978 = vpow.pop %v1977
      %v1979 = vmul.f32 %v1883, 1.442695
      %v1980 = vpow.pop %v1979
      %v1981 = vmul.f32 %v1884, 1.442695
      %v1982 = vpow.pop %v1981
      %v1983 = vmul.f32 %v1885, 1.442695
      %v1984 = vpow.pop %v1983
      %v1985 = vmul.f32 %v1886, 1.442695
      %v1986 = vpow.pop %v1985
      %v1987 = vmul.f32 %v1887, 1.442695
      %v1988 = vpow.pop %v1987
      %v1989 = vmul.f32 %v1888, 1.442695
      %v1990 = vpow.pop %v1989
      %v1991 = vmul.f32 %v1889, 1.442695
      %v1992 = vpow.pop %v1991
      %v1993 = vmul.f32 %v1890, 1.442695
      %v1994 = vpow.pop %v1993
      %v1995 = vmul.f32 %v1891, 1.442695
      %v1996 = vpow.pop %v1995
      %v1997 = vmul.f32 %v1892, 1.442695
      %v1998 = vpow.pop %v1997
      %v1999 = vmul.f32 %v1893, 1.442695
      %v2000 = vpow.pop %v1999
      %v2001 = vmul.f32 %v1894, 1.442695
      %v2002 = vpow.pop %v2001
      %v2003 = vmul.f32 %v1895, 1.442695
      %v2004 = vpow.pop %v2003
      %v2005 = vmul.f32 %v1896, 1.442695
      %v2006 = vpow.pop %v2005
      %v2007 = vmul.f32 %v1897, 1.442695
      %v2008 = vpow.pop %v2007
      %v2009 = vmul.f32 %v1898, 1.442695
      %v2010 = vpow.pop %v2009
      %v2011 = vmul.f32 %v1899, 1.442695
      %v2012 = vpow.pop %v2011
      %v2013 = vmul.f32 %v1900, 1.442695
      %v2014 = vpow.pop %v2013
      %v2015 = vmul.f32 %v1901, 1.442695
      %v2016 = vpow.pop %v2015
      %v2017 = vmul.f32 %v1902, 1.442695
      %v2018 = vpow.pop %v2017
      %v2019 = vmul.f32 %v1903, 1.442695
      %v2020 = vpow.pop %v2019
      %v2021 = vmul.f32 %v1904, 1.442695
      %v2022 = vpow.pop %v2021
      %v2023 = vmul.f32 %v1905, 1.442695
      %v2024 = vpow.pop %v2023
      %v2025 = vmul.f32 %v1906, 1.442695
      %v2026 = vpow.pop %v2025
      %v2027 = vmul.f32 %v1907, 1.442695
      %v2028 = vpow.pop %v2027
      %v2029 = vmul.f32 %v1908, 1.442695
      %v2030 = vpow.pop %v2029
      %v2031 = vmul.f32 %v1909, 1.442695
      %v2032 = vpow.pop %v2031
      %v2033 = vmul.f32 %v1910, 1.442695
      %v2034 = vpow.pop %v2033
      %v2035 = vmul.f32 %v1911, 1.442695
      %v2036 = vpow.pop %v2035
      %v2037 = vmul.f32 %v1912, 1.442695
      %v2038 = vpow.pop %v2037
      %v2039 = vmul.f32 %v1913, 1.442695
      %v2040 = vpow.pop %v2039
      %v2041 = vmul.f32 %v1914, 1.442695
      %v2042 = vpow.pop %v2041
      %v2043 = vadd.f32 %v1916, %v1918
      %2044 = vadd.xlane.f32.xlu0 %v2043
      %v2045 = vpop.xlane.xlu0 %2044
      %v2046 = vadd.f32 %v1920, %v1922
      %2047 = vadd.xlane.f32.xlu0 %v2046
      %v2048 = vpop.xlane.xlu0 %2047
      %v2049 = vadd.f32 %v1924, %v1926
      %2050 = vadd.xlane.f32.xlu0 %v2049
      %v2051 = vpop.xlane.xlu0 %2050
      %v2052 = vadd.f32 %v1928, %v1930
      %2053 = vadd.xlane.f32.xlu0 %v2052
      %v2054 = vpop.xlane.xlu0 %2053
      %v2055 = vadd.f32 %v1932, %v1934
      %2056 = vadd.xlane.f32.xlu0 %v2055
      %v2057 = vpop.xlane.xlu0 %2056
      %v2058 = vadd.f32 %v1936, %v1938
      %2059 = vadd.xlane.f32.xlu0 %v2058
      %v2060 = vpop.xlane.xlu0 %2059
      %v2061 = vadd.f32 %v1940, %v1942
      %2062 = vadd.xlane.f32.xlu0 %v2061
      %v2063 = vpop.xlane.xlu0 %2062
      %v2064 = vadd.f32 %v1944, %v1946
      %2065 = vadd.xlane.f32.xlu0 %v2064
      %v2066 = vpop.xlane.xlu0 %2065
      %v2067 = vadd.f32 %v1948, %v1950
      %2068 = vadd.xlane.f32.xlu0 %v2067
      %v2069 = vpop.xlane.xlu0 %2068
      %v2070 = vadd.f32 %v1952, %v1954
      %2071 = vadd.xlane.f32.xlu0 %v2070
      %v2072 = vpop.xlane.xlu0 %2071
      %v2073 = vadd.f32 %v1956, %v1958
      %2074 = vadd.xlane.f32.xlu0 %v2073
      %v2075 = vpop.xlane.xlu0 %2074
      %v2076 = vadd.f32 %v1960, %v1962
      %2077 = vadd.xlane.f32.xlu0 %v2076
      %v2078 = vpop.xlane.xlu0 %2077
      %v2079 = vadd.f32 %v1964, %v1966
      %2080 = vadd.xlane.f32.xlu0 %v2079
      %v2081 = vpop.xlane.xlu0 %2080
      %v2082 = vadd.f32 %v1968, %v1970
      %2083 = vadd.xlane.f32.xlu0 %v2082
      %v2084 = vpop.xlane.xlu0 %2083
      %v2085 = vadd.f32 %v1972, %v1974
      %2086 = vadd.xlane.f32.xlu0 %v2085
      %v2087 = vpop.xlane.xlu0 %2086
      %v2088 = vadd.f32 %v1976, %v1978
      %2089 = vadd.xlane.f32.xlu0 %v2088
      %v2090 = vpop.xlane.xlu0 %2089
      %v2091 = vadd.f32 %v1980, %v1982
      %2092 = vadd.xlane.f32.xlu0 %v2091
      %v2093 = vpop.xlane.xlu0 %2092
      %v2094 = vadd.f32 %v1984, %v1986
      %2095 = vadd.xlane.f32.xlu0 %v2094
      %v2096 = vpop.xlane.xlu0 %2095
      %v2097 = vadd.f32 %v1988, %v1990
      %2098 = vadd.xlane.f32.xlu0 %v2097
      %v2099 = vpop.xlane.xlu0 %2098
      %v2100 = vadd.f32 %v1992, %v1994
      %2101 = vadd.xlane.f32.xlu0 %v2100
      %v2102 = vpop.xlane.xlu0 %2101
      %v2103 = vadd.f32 %v1996, %v1998
      %2104 = vadd.xlane.f32.xlu0 %v2103
      %v2105 = vpop.xlane.xlu0 %2104
      %v2106 = vadd.f32 %v2000, %v2002
      %2107 = vadd.xlane.f32.xlu0 %v2106
      %v2108 = vpop.xlane.xlu0 %2107
      %v2109 = vadd.f32 %v2004, %v2006
      %2110 = vadd.xlane.f32.xlu0 %v2109
      %v2111 = vpop.xlane.xlu0 %2110
      %v2112 = vadd.f32 %v2008, %v2010
      %2113 = vadd.xlane.f32.xlu0 %v2112
      %v2114 = vpop.xlane.xlu0 %2113
      %v2115 = vadd.f32 %v2012, %v2014
      %2116 = vadd.xlane.f32.xlu0 %v2115
      %v2117 = vpop.xlane.xlu0 %2116
      %v2118 = vadd.f32 %v2016, %v2018
      %2119 = vadd.xlane.f32.xlu0 %v2118
      %v2120 = vpop.xlane.xlu0 %2119
      %v2121 = vadd.f32 %v2020, %v2022
      %2122 = vadd.xlane.f32.xlu0 %v2121
      %v2123 = vpop.xlane.xlu0 %2122
      %v2124 = vadd.f32 %v2024, %v2026
      %2125 = vadd.xlane.f32.xlu0 %v2124
      %v2126 = vpop.xlane.xlu0 %2125
      %v2127 = vadd.f32 %v2028, %v2030
      %2128 = vadd.xlane.f32.xlu0 %v2127
      %v2129 = vpop.xlane.xlu0 %2128
      %v2130 = vadd.f32 %v2032, %v2034
      %2131 = vadd.xlane.f32.xlu0 %v2130
      %v2132 = vpop.xlane.xlu0 %2131
      %v2133 = vadd.f32 %v2036, %v2038
      %2134 = vadd.xlane.f32.xlu0 %v2133
      %v2135 = vpop.xlane.xlu0 %2134
      %v2136 = vadd.f32 %v2040, %v2042
      %2137 = vadd.xlane.f32.xlu0 %v2136
      %v2138 = vpop.xlane.xlu0 %2137
      %v2139 = vrcp.pop %v2045
      %v2140 = vrcp.pop %v2048
      %v2141 = vrcp.pop %v2051
      %v2142 = vrcp.pop %v2054
      %v2143 = vrcp.pop %v2057
      %v2144 = vrcp.pop %v2060
      %v2145 = vrcp.pop %v2063
      %v2146 = vrcp.pop %v2066
      %v2147 = vrcp.pop %v2069
      %v2148 = vrcp.pop %v2072
      %v2149 = vrcp.pop %v2075
      %v2150 = vrcp.pop %v2078
      %v2151 = vrcp.pop %v2081
      %v2152 = vrcp.pop %v2084
      %v2153 = vrcp.pop %v2087
      %v2154 = vrcp.pop %v2090
      %v2155 = vrcp.pop %v2093
      %v2156 = vrcp.pop %v2096
      %v2157 = vrcp.pop %v2099
      %v2158 = vrcp.pop %v2102
      %v2159 = vrcp.pop %v2105
      %v2160 = vrcp.pop %v2108
      %v2161 = vrcp.pop %v2111
      %v2162 = vrcp.pop %v2114
      %v2163 = vrcp.pop %v2117
      %v2164 = vrcp.pop %v2120
      %v2165 = vrcp.pop %v2123
      %v2166 = vrcp.pop %v2126
      %v2167 = vrcp.pop %v2129
      %v2168 = vrcp.pop %v2132
      %v2169 = vrcp.pop %v2135
      %v2170 = vrcp.pop %v2138
      %v2171 = vmul.f32 %v1916, %v2139
      %v2172 = vmul.f32 %v1918, %v2139
      %v2173 = vmul.f32 %v1920, %v2140
      %v2174 = vmul.f32 %v1922, %v2140
      %v2175 = vmul.f32 %v1924, %v2141
      %v2176 = vmul.f32 %v1926, %v2141
      %v2177 = vmul.f32 %v1928, %v2142
      %v2178 = vmul.f32 %v1930, %v2142
      %v2179 = vmul.f32 %v1932, %v2143
      %v2180 = vmul.f32 %v1934, %v2143
      %v2181 = vmul.f32 %v1936, %v2144
      %v2182 = vmul.f32 %v1938, %v2144
      %v2183 = vmul.f32 %v1940, %v2145
      %v2184 = vmul.f32 %v1942, %v2145
      %v2185 = vmul.f32 %v1944, %v2146
      %v2186 = vmul.f32 %v1946, %v2146
      %v2187 = vmul.f32 %v1948, %v2147
      %v2188 = vmul.f32 %v1950, %v2147
      %v2189 = vmul.f32 %v1952, %v2148
      %v2190 = vmul.f32 %v1954, %v2148
      %v2191 = vmul.f32 %v1956, %v2149
      %v2192 = vmul.f32 %v1958, %v2149
      %v2193 = vmul.f32 %v1960, %v2150
      %v2194 = vmul.f32 %v1962, %v2150
      %v2195 = vmul.f32 %v1964, %v2151
      %v2196 = vmul.f32 %v1966, %v2151
      %v2197 = vmul.f32 %v1968, %v2152
      %v2198 = vmul.f32 %v1970, %v2152
      %v2199 = vmul.f32 %v1972, %v2153
      %v2200 = vmul.f32 %v1974, %v2153
      %v2201 = vmul.f32 %v1976, %v2154
      %v2202 = vmul.f32 %v1978, %v2154
      %v2203 = vmul.f32 %v1980, %v2155
      %v2204 = vmul.f32 %v1982, %v2155
      %v2205 = vmul.f32 %v1984, %v2156
      %v2206 = vmul.f32 %v1986, %v2156
      %v2207 = vmul.f32 %v1988, %v2157
      %v2208 = vmul.f32 %v1990, %v2157
      %v2209 = vmul.f32 %v1992, %v2158
      %v2210 = vmul.f32 %v1994, %v2158
      %v2211 = vmul.f32 %v1996, %v2159
      %v2212 = vmul.f32 %v1998, %v2159
      %v2213 = vmul.f32 %v2000, %v2160
      %v2214 = vmul.f32 %v2002, %v2160
      %v2215 = vmul.f32 %v2004, %v2161
      %v2216 = vmul.f32 %v2006, %v2161
      %v2217 = vmul.f32 %v2008, %v2162
      %v2218 = vmul.f32 %v2010, %v2162
      %v2219 = vmul.f32 %v2012, %v2163
      %v2220 = vmul.f32 %v2014, %v2163
      %v2221 = vmul.f32 %v2016, %v2164
      %v2222 = vmul.f32 %v2018, %v2164
      %v2223 = vmul.f32 %v2020, %v2165
      %v2224 = vmul.f32 %v2022, %v2165
      %v2225 = vmul.f32 %v2024, %v2166
      %v2226 = vmul.f32 %v2026, %v2166
      %v2227 = vmul.f32 %v2028, %v2167
      %v2228 = vmul.f32 %v2030, %v2167
      %v2229 = vmul.f32 %v2032, %v2168
      %v2230 = vmul.f32 %v2034, %v2168
      %v2231 = vmul.f32 %v2036, %v2169
      %v2232 = vmul.f32 %v2038, %v2169
      %v2233 = vmul.f32 %v2040, %v2170
      %v2234 = vmul.f32 %v2042, %v2170
      %v2235 = vpack.c.bf16 %v2173, %v2171
      %v2236 = vpack.c.bf16 %v2174, %v2172
      %v2237 = vpack.c.bf16 %v2177, %v2175
      %v2238 = vpack.c.bf16 %v2178, %v2176
      %v2239 = vpack.c.bf16 %v2181, %v2179
      %v2240 = vpack.c.bf16 %v2182, %v2180
      %v2241 = vpack.c.bf16 %v2185, %v2183
      %v2242 = vpack.c.bf16 %v2186, %v2184
      %v2243 = vpack.c.bf16 %v2189, %v2187
      %v2244 = vpack.c.bf16 %v2190, %v2188
      %v2245 = vpack.c.bf16 %v2193, %v2191
      %v2246 = vpack.c.bf16 %v2194, %v2192
      %v2247 = vpack.c.bf16 %v2197, %v2195
      %v2248 = vpack.c.bf16 %v2198, %v2196
      %v2249 = vpack.c.bf16 %v2201, %v2199
      %v2250 = vpack.c.bf16 %v2202, %v2200
      %v2251 = vpack.c.bf16 %v2205, %v2203
      %v2252 = vpack.c.bf16 %v2206, %v2204
      %v2253 = vpack.c.bf16 %v2209, %v2207
      %v2254 = vpack.c.bf16 %v2210, %v2208
      %v2255 = vpack.c.bf16 %v2213, %v2211
      %v2256 = vpack.c.bf16 %v2214, %v2212
      %v2257 = vpack.c.bf16 %v2217, %v2215
      %v2258 = vpack.c.bf16 %v2218, %v2216
      %v2259 = vpack.c.bf16 %v2221, %v2219
      %v2260 = vpack.c.bf16 %v2222, %v2220
      %v2261 = vpack.c.bf16 %v2225, %v2223
      %v2262 = vpack.c.bf16 %v2226, %v2224
      %v2263 = vpack.c.bf16 %v2229, %v2227
      %v2264 = vpack.c.bf16 %v2230, %v2228
      %v2265 = vpack.c.bf16 %v2233, %v2231
      %v2266 = vpack.c.bf16 %v2234, %v2232
      %v2267 = vld [vmem:[%s289] sm:$0xf]
      %v2268 = vld [vmem:[%s289 + $0x4] sm:$0xf]
      %v2269 = vld [vmem:[%s289 + $0x8] sm:$0xf]
      %v2270 = vld [vmem:[%s289 + $0xc] sm:$0xf]
      %v2271 = vld [vmem:[%s289 + $0x10] sm:$0xf]
      %v2272 = vld [vmem:[%s289 + $0x14] sm:$0xf]
      %v2273 = vld [vmem:[%s289 + $0x18] sm:$0xf]
      %v2274 = vld [vmem:[%s289 + $0x1c] sm:$0xf]
      %v2275 = vld [vmem:[%s289 + $0x20] sm:$0xf]
      %v2276 = vld [vmem:[%s289 + $0x24] sm:$0xf]
      %v2277 = vld [vmem:[%s289 + $0x28] sm:$0xf]
      %v2278 = vld [vmem:[%s289 + $0x2c] sm:$0xf]
      %v2279 = vld [vmem:[%s289 + $0x30] sm:$0xf]
      %v2280 = vld [vmem:[%s289 + $0x34] sm:$0xf]
      %v2281 = vld [vmem:[%s289 + $0x38] sm:$0xf]
      %v2282 = vld [vmem:[%s289 + $0x3c] sm:$0xf]
      %v2283 = vld [vmem:[%s289 + $0x40] sm:$0xf]
      %v2284 = vld [vmem:[%s289 + $0x44] sm:$0xf]
      %v2285 = vld [vmem:[%s289 + $0x48] sm:$0xf]
      %v2286 = vld [vmem:[%s289 + $0x4c] sm:$0xf]
      %v2287 = vld [vmem:[%s289 + $0x50] sm:$0xf]
      %v2288 = vld [vmem:[%s289 + $0x54] sm:$0xf]
      %v2289 = vld [vmem:[%s289 + $0x58] sm:$0xf]
      %v2290 = vld [vmem:[%s289 + $0x5c] sm:$0xf]
      %v2291 = vld [vmem:[%s289 + $0x60] sm:$0xf]
      %v2292 = vld [vmem:[%s289 + $0x64] sm:$0xf]
      %v2293 = vld [vmem:[%s289 + $0x68] sm:$0xf]
      %v2294 = vld [vmem:[%s289 + $0x6c] sm:$0xf]
      %v2295 = vld [vmem:[%s289 + $0x70] sm:$0xf]
      %v2296 = vld [vmem:[%s289 + $0x74] sm:$0xf]
      %v2297 = vld [vmem:[%s289 + $0x78] sm:$0xf]
      %v2298 = vld [vmem:[%s289 + $0x7c] sm:$0xf]
      %v2331 = vunpack.c.l.b16 %v2267
      %v2332 = vunpack.c.l.b16 %v2268
      %v2333 = vunpack.c.l.b16 %v2269
      %v2334 = vunpack.c.l.b16 %v2270
      %v2335 = vunpack.c.l.b16 %v2271
      %v2336 = vunpack.c.l.b16 %v2272
      %v2337 = vunpack.c.l.b16 %v2273
      %v2338 = vunpack.c.l.b16 %v2274
      %v2339 = vunpack.c.l.b16 %v2275
      %v2340 = vunpack.c.l.b16 %v2276
      %v2341 = vunpack.c.l.b16 %v2277
      %v2342 = vunpack.c.l.b16 %v2278
      %v2343 = vunpack.c.l.b16 %v2279
      %v2344 = vunpack.c.l.b16 %v2280
      %v2345 = vunpack.c.l.b16 %v2281
      %v2346 = vunpack.c.l.b16 %v2282
      %v2347 = vunpack.c.l.b16 %v2283
      %v2348 = vunpack.c.l.b16 %v2284
      %v2349 = vunpack.c.l.b16 %v2285
      %v2350 = vunpack.c.l.b16 %v2286
      %v2351 = vunpack.c.l.b16 %v2287
      %v2352 = vunpack.c.l.b16 %v2288
      %v2353 = vunpack.c.l.b16 %v2289
      %v2354 = vunpack.c.l.b16 %v2290
      %v2355 = vunpack.c.l.b16 %v2291
      %v2356 = vunpack.c.l.b16 %v2292
      %v2357 = vunpack.c.l.b16 %v2293
      %v2358 = vunpack.c.l.b16 %v2294
      %v2359 = vunpack.c.l.b16 %v2295
      %v2360 = vunpack.c.l.b16 %v2296
      %v2361 = vunpack.c.l.b16 %v2297
      %v2362 = vunpack.c.l.b16 %v2298
      %v2363 = vpack.c.b16 %v2332, %v2331
      %v2364 = vpack.c.b16 %v2334, %v2333
      %v2365 = vpack.c.b16 %v2336, %v2335
      %v2366 = vpack.c.b16 %v2338, %v2337
      %v2367 = vpack.c.b16 %v2340, %v2339
      %v2368 = vpack.c.b16 %v2342, %v2341
      %v2369 = vpack.c.b16 %v2344, %v2343
      %v2370 = vpack.c.b16 %v2346, %v2345
      %v2371 = vpack.c.b16 %v2348, %v2347
      %v2372 = vpack.c.b16 %v2350, %v2349
      %v2373 = vpack.c.b16 %v2352, %v2351
      %v2374 = vpack.c.b16 %v2354, %v2353
      %v2375 = vpack.c.b16 %v2356, %v2355
      %v2376 = vpack.c.b16 %v2358, %v2357
      %v2377 = vpack.c.b16 %v2360, %v2359
      %v2378 = vpack.c.b16 %v2362, %v2361
      %2395 = vmatprep.subr.bf16.mxu0 0
      %2396 = vmatpush1.bf16.msra.mxu0 %v2363
      %2397 = vmatprep.subr.bf16.mxu0 0
      %2398 = vmatpush1.bf16.msra.mxu0 %v2364
      %2399 = vmatprep.subr.bf16.mxu0 0
      %2400 = vmatpush1.bf16.msra.mxu0 %v2365
      %2401 = vmatprep.subr.bf16.mxu0 0
      %2402 = vmatpush1.bf16.msra.mxu0 %v2366
      %2403 = vmatprep.subr.bf16.mxu0 0
      %2404 = vmatpush1.bf16.msra.mxu0 %v2367
      %2405 = vmatprep.subr.bf16.mxu0 0
      %2406 = vmatpush1.bf16.msra.mxu0 %v2368
      %2407 = vmatprep.subr.bf16.mxu0 0
      %2408 = vmatpush1.bf16.msra.mxu0 %v2369
      %2409 = vmatprep.subr.bf16.mxu0 0
      %2410 = vmatpush1.bf16.msra.mxu0 %v2370
      %2411 = vmatprep.subr.bf16.mxu0 0
      %2412 = vmatpush1.bf16.msra.mxu0 %v2371
      %2413 = vmatprep.subr.bf16.mxu0 0
      %2414 = vmatpush1.bf16.msra.mxu0 %v2372
      %2415 = vmatprep.subr.bf16.mxu0 0
      %2416 = vmatpush1.bf16.msra.mxu0 %v2373
      %2417 = vmatprep.subr.bf16.mxu0 0
      %2418 = vmatpush1.bf16.msra.mxu0 %v2374
      %2419 = vmatprep.subr.bf16.mxu0 0
      %2420 = vmatpush1.bf16.msra.mxu0 %v2375
      %2421 = vmatprep.subr.bf16.mxu0 0
      %2422 = vmatpush1.bf16.msra.mxu0 %v2376
      %2423 = vmatprep.subr.bf16.mxu0 0
      %2424 = vmatpush1.bf16.msra.mxu0 %v2377
      %2425 = vmatprep.subr.bf16.mxu0 0
      %2426 = vmatpush1.bf16.msra.mxu0 %v2378
      %2427 = vmatprep.mubr.bf16.mxu0 %v2236
      %2428 = vmatmul.mubr.bf16.gmra.mrb[0].mxu0 %v2235
      %v2429 = vpop.f32.mrb[0].mxu0
      %v2430 = vadd.f32 0.0, %v2429
      %v2431 = vpop.f32.mrb[0].mxu0
      %v2432 = vpop.f32.mrb[0].mxu0
      %v2433 = vadd.f32 0.0, %v2432
      %v2434 = vpop.f32.mrb[0].mxu0
      %2435 = vmatprep.mubr.bf16.mxu0 %v2238
      %2436 = vmatmul.mubr.bf16.gmra.mrb[0].mxu0 %v2237
      %v2437 = vpop.f32.mrb[0].mxu0
      %v2438 = vadd.f32 0.0, %v2437
      %v2439 = vpop.f32.mrb[0].mxu0
      %v2440 = vpop.f32.mrb[0].mxu0
      %v2441 = vadd.f32 0.0, %v2440
      %v2442 = vpop.f32.mrb[0].mxu0
      %2443 = vmatprep.mubr.bf16.mxu0 %v2240
      %2444 = vmatmul.mubr.bf16.gmra.mrb[0].mxu0 %v2239
      %v2445 = vpop.f32.mrb[0].mxu0
      %v2446 = vadd.f32 0.0, %v2445
      %v2447 = vpop.f32.mrb[0].mxu0
      %v2448 = vpop.f32.mrb[0].mxu0
      %v2449 = vadd.f32 0.0, %v2448
      %v2450 = vpop.f32.mrb[0].mxu0
      %2451 = vmatprep.mubr.bf16.mxu0 %v2242
      %2452 = vmatmul.mubr.bf16.gmra.mrb[0].mxu0 %v2241
      %v2453 = vpop.f32.mrb[0].mxu0
      %v2454 = vadd.f32 0.0, %v2453
      %v2455 = vpop.f32.mrb[0].mxu0
      %v2456 = vpop.f32.mrb[0].mxu0
      %v2457 = vadd.f32 0.0, %v2456
      %v2458 = vpop.f32.mrb[0].mxu0
      %2459 = vmatprep.mubr.bf16.mxu0 %v2244
      %2460 = vmatmul.mubr.bf16.gmra.mrb[0].mxu0 %v2243
      %v2461 = vpop.f32.mrb[0].mxu0
      %v2462 = vadd.f32 0.0, %v2461
      %v2463 = vpop.f32.mrb[0].mxu0
      %v2464 = vpop.f32.mrb[0].mxu0
      %v2465 = vadd.f32 0.0, %v2464
      %v2466 = vpop.f32.mrb[0].mxu0
      %2467 = vmatprep.mubr.bf16.mxu0 %v2246
      %2468 = vmatmul.mubr.bf16.gmra.mrb[0].mxu0 %v2245
      %v2469 = vpop.f32.mrb[0].mxu0
      %v2470 = vadd.f32 0.0, %v2469
      %v2471 = vpop.f32.mrb[0].mxu0
      %v2472 = vpop.f32.mrb[0].mxu0
      %v2473 = vadd.f32 0.0, %v2472
      %v2474 = vpop.f32.mrb[0].mxu0
      %2475 = vmatprep.mubr.bf16.mxu0 %v2248
      %2476 = vmatmul.mubr.bf16.gmra.mrb[0].mxu0 %v2247
      %v2477 = vpop.f32.mrb[0].mxu0
      %v2478 = vadd.f32 0.0, %v2477
      %v2479 = vpop.f32.mrb[0].mxu0
      %v2480 = vpop.f32.mrb[0].mxu0
      %v2481 = vadd.f32 0.0, %v2480
      %v2482 = vpop.f32.mrb[0].mxu0
      %2483 = vmatprep.mubr.bf16.mxu0 %v2250
      %2484 = vmatmul.mubr.bf16.gmra.mrb[0].mxu0 %v2249
      %v2485 = vpop.f32.mrb[0].mxu0
      %v2486 = vadd.f32 0.0, %v2485
      %v2487 = vpop.f32.mrb[0].mxu0
      %v2488 = vpop.f32.mrb[0].mxu0
      %v2489 = vadd.f32 0.0, %v2488
      %v2490 = vpop.f32.mrb[0].mxu0
      %2491 = vmatprep.mubr.bf16.mxu0 %v2252
      %2492 = vmatmul.mubr.bf16.gmra.mrb[0].mxu0 %v2251
      %v2493 = vpop.f32.mrb[0].mxu0
      %v2494 = vadd.f32 0.0, %v2493
      %v2495 = vpop.f32.mrb[0].mxu0
      %v2496 = vpop.f32.mrb[0].mxu0
      %v2497 = vadd.f32 0.0, %v2496
      %v2498 = vpop.f32.mrb[0].mxu0
      %2499 = vmatprep.mubr.bf16.mxu0 %v2254
      %2500 = vmatmul.mubr.bf16.gmra.mrb[0].mxu0 %v2253
      %v2501 = vpop.f32.mrb[0].mxu0
      %v2502 = vadd.f32 0.0, %v2501
      %v2503 = vpop.f32.mrb[0].mxu0
      %v2504 = vpop.f32.mrb[0].mxu0
      %v2505 = vadd.f32 0.0, %v2504
      %v2506 = vpop.f32.mrb[0].mxu0
      %2507 = vmatprep.mubr.bf16.mxu0 %v2256
      %2508 = vmatmul.mubr.bf16.gmra.mrb[0].mxu0 %v2255
      %v2509 = vpop.f32.mrb[0].mxu0
      %v2510 = vadd.f32 0.0, %v2509
      %v2511 = vpop.f32.mrb[0].mxu0
      %v2512 = vpop.f32.mrb[0].mxu0
      %v2513 = vadd.f32 0.0, %v2512
      %v2514 = vpop.f32.mrb[0].mxu0
      %2515 = vmatprep.mubr.bf16.mxu0 %v2258
      %2516 = vmatmul.mubr.bf16.gmra.mrb[0].mxu0 %v2257
      %v2517 = vpop.f32.mrb[0].mxu0
      %v2518 = vadd.f32 0.0, %v2517
      %v2519 = vpop.f32.mrb[0].mxu0
      %v2520 = vpop.f32.mrb[0].mxu0
      %v2521 = vadd.f32 0.0, %v2520
      %v2522 = vpop.f32.mrb[0].mxu0
      %2523 = vmatprep.mubr.bf16.mxu0 %v2260
      %2524 = vmatmul.mubr.bf16.gmra.mrb[0].mxu0 %v2259
      %v2525 = vpop.f32.mrb[0].mxu0
      %v2526 = vadd.f32 0.0, %v2525
      %v2527 = vpop.f32.mrb[0].mxu0
      %v2528 = vpop.f32.mrb[0].mxu0
      %v2529 = vadd.f32 0.0, %v2528
      %v2530 = vpop.f32.mrb[0].mxu0
      %2531 = vmatprep.mubr.bf16.mxu0 %v2262
      %2532 = vmatmul.mubr.bf16.gmra.mrb[0].mxu0 %v2261
      %v2533 = vpop.f32.mrb[0].mxu0
      %v2534 = vadd.f32 0.0, %v2533
      %v2535 = vpop.f32.mrb[0].mxu0
      %v2536 = vpop.f32.mrb[0].mxu0
      %v2537 = vadd.f32 0.0, %v2536
      %v2538 = vpop.f32.mrb[0].mxu0
      %2539 = vmatprep.mubr.bf16.mxu0 %v2264
      %2540 = vmatmul.mubr.bf16.gmra.mrb[0].mxu0 %v2263
      %v2541 = vpop.f32.mrb[0].mxu0
      %v2542 = vadd.f32 0.0, %v2541
      %v2543 = vpop.f32.mrb[0].mxu0
      %v2544 = vpop.f32.mrb[0].mxu0
      %v2545 = vadd.f32 0.0, %v2544
      %v2546 = vpop.f32.mrb[0].mxu0
      %2547 = vmatprep.mubr.bf16.mxu0 %v2266
      %2548 = vmatmul.mubr.bf16.gmra.mrb[0].mxu0 %v2265
      %v2549 = vpop.f32.mrb[0].mxu0
      %v2550 = vadd.f32 0.0, %v2549
      %v2551 = vpop.f32.mrb[0].mxu0
      %v2552 = vpop.f32.mrb[0].mxu0
      %v2553 = vadd.f32 0.0, %v2552
      %v2554 = vpop.f32.mrb[0].mxu0
      %2555 = vdwg.mxu0
      %v2556 = vpack.c.bf16 %v2433, %v2430
      %v2557 = vpack.c.bf16 %v2441, %v2438
      %v2558 = vpack.c.bf16 %v2449, %v2446
      %v2559 = vpack.c.bf16 %v2457, %v2454
      %v2560 = vpack.c.bf16 %v2465, %v2462
      %v2561 = vpack.c.bf16 %v2473, %v2470
      %v2562 = vpack.c.bf16 %v2481, %v2478
      %v2563 = vpack.c.bf16 %v2489, %v2486
      %v2564 = vpack.c.bf16 %v2497, %v2494
      %v2565 = vpack.c.bf16 %v2505, %v2502
      %v2566 = vpack.c.bf16 %v2513, %v2510
      %v2567 = vpack.c.bf16 %v2521, %v2518
      %v2568 = vpack.c.bf16 %v2529, %v2526
      %v2569 = vpack.c.bf16 %v2537, %v2534
      %v2570 = vpack.c.bf16 %v2545, %v2542
      %v2571 = vpack.c.bf16 %v2553, %v2550
      %v2588 = vunpack.c.l.b16 %v2556
      %v2589 = vunpack.c.h.b16 %v2556
      %v2590 = vunpack.c.l.b16 %v2557
      %v2591 = vunpack.c.h.b16 %v2557
      %v2592 = vunpack.c.l.b16 %v2558
      %v2593 = vunpack.c.h.b16 %v2558
      %v2594 = vunpack.c.l.b16 %v2559
      %v2595 = vunpack.c.h.b16 %v2559
      %v2596 = vunpack.c.l.b16 %v2560
      %v2597 = vunpack.c.h.b16 %v2560
      %v2598 = vunpack.c.l.b16 %v2561
      %v2599 = vunpack.c.h.b16 %v2561
      %v2600 = vunpack.c.l.b16 %v2562
      %v2601 = vunpack.c.h.b16 %v2562
      %v2602 = vunpack.c.l.b16 %v2563
      %v2603 = vunpack.c.h.b16 %v2563
      %v2604 = vunpack.c.l.b16 %v2564
      %v2605 = vunpack.c.h.b16 %v2564
      %v2606 = vunpack.c.l.b16 %v2565
      %v2607 = vunpack.c.h.b16 %v2565
      %v2608 = vunpack.c.l.b16 %v2566
      %v2609 = vunpack.c.h.b16 %v2566
      %v2610 = vunpack.c.l.b16 %v2567
      %v2611 = vunpack.c.h.b16 %v2567
      %v2612 = vunpack.c.l.b16 %v2568
      %v2613 = vunpack.c.h.b16 %v2568
      %v2614 = vunpack.c.l.b16 %v2569
      %v2615 = vunpack.c.h.b16 %v2569
      %v2616 = vunpack.c.l.b16 %v2570
      %v2617 = vunpack.c.h.b16 %v2570
      %v2618 = vunpack.c.l.b16 %v2571
      %v2619 = vunpack.c.h.b16 %v2571
      %v2620 = vpack.c.b16 %v2588, %v2588
      %v2621 = vpack.c.b16 %v2589, %v2589
      %v2622 = vpack.c.b16 %v2590, %v2590
      %v2623 = vpack.c.b16 %v2591, %v2591
      %v2624 = vpack.c.b16 %v2592, %v2592
      %v2625 = vpack.c.b16 %v2593, %v2593
      %v2626 = vpack.c.b16 %v2594, %v2594
      %v2627 = vpack.c.b16 %v2595, %v2595
      %v2628 = vpack.c.b16 %v2596, %v2596
      %v2629 = vpack.c.b16 %v2597, %v2597
      %v2630 = vpack.c.b16 %v2598, %v2598
      %v2631 = vpack.c.b16 %v2599, %v2599
      %v2632 = vpack.c.b16 %v2600, %v2600
      %v2633 = vpack.c.b16 %v2601, %v2601
      %v2634 = vpack.c.b16 %v2602, %v2602
      %v2635 = vpack.c.b16 %v2603, %v2603
      %v2636 = vpack.c.b16 %v2604, %v2604
      %v2637 = vpack.c.b16 %v2605, %v2605
      %v2638 = vpack.c.b16 %v2606, %v2606
      %v2639 = vpack.c.b16 %v2607, %v2607
      %v2640 = vpack.c.b16 %v2608, %v2608
      %v2641 = vpack.c.b16 %v2609, %v2609
      %v2642 = vpack.c.b16 %v2610, %v2610
      %v2643 = vpack.c.b16 %v2611, %v2611
      %v2644 = vpack.c.b16 %v2612, %v2612
      %v2645 = vpack.c.b16 %v2613, %v2613
      %v2646 = vpack.c.b16 %v2614, %v2614
      %v2647 = vpack.c.b16 %v2615, %v2615
      %v2648 = vpack.c.b16 %v2616, %v2616
      %v2649 = vpack.c.b16 %v2617, %v2617
      %v2650 = vpack.c.b16 %v2618, %v2618
      %v2651 = vpack.c.b16 %v2619, %v2619
      %vm2684 = vcmask 257024
      %2685 = vst.msk [vmem:[%s298] sm:$0xf] %vm2684, %v2620
      %2686 = vst.msk [vmem:[%s298 + $0x4] sm:$0xf] %vm2684, %v2621
      %2687 = vst.msk [vmem:[%s298 + $0x8] sm:$0xf] %vm2684, %v2622
      %2688 = vst.msk [vmem:[%s298 + $0xc] sm:$0xf] %vm2684, %v2623
      %2689 = vst.msk [vmem:[%s298 + $0x10] sm:$0xf] %vm2684, %v2624
      %2690 = vst.msk [vmem:[%s298 + $0x14] sm:$0xf] %vm2684, %v2625
      %2691 = vst.msk [vmem:[%s298 + $0x18] sm:$0xf] %vm2684, %v2626
      %2692 = vst.msk [vmem:[%s298 + $0x1c] sm:$0xf] %vm2684, %v2627
      %2693 = vst.msk [vmem:[%s298 + $0x20] sm:$0xf] %vm2684, %v2628
      %2694 = vst.msk [vmem:[%s298 + $0x24] sm:$0xf] %vm2684, %v2629
      %2695 = vst.msk [vmem:[%s298 + $0x28] sm:$0xf] %vm2684, %v2630
      %2696 = vst.msk [vmem:[%s298 + $0x2c] sm:$0xf] %vm2684, %v2631
      %2697 = vst.msk [vmem:[%s298 + $0x30] sm:$0xf] %vm2684, %v2632
      %2698 = vst.msk [vmem:[%s298 + $0x34] sm:$0xf] %vm2684, %v2633
      %2699 = vst.msk [vmem:[%s298 + $0x38] sm:$0xf] %vm2684, %v2634
      %2700 = vst.msk [vmem:[%s298 + $0x3c] sm:$0xf] %vm2684, %v2635
      %2701 = vst.msk [vmem:[%s298 + $0x40] sm:$0xf] %vm2684, %v2636
      %2702 = vst.msk [vmem:[%s298 + $0x44] sm:$0xf] %vm2684, %v2637
      %2703 = vst.msk [vmem:[%s298 + $0x48] sm:$0xf] %vm2684, %v2638
      %2704 = vst.msk [vmem:[%s298 + $0x4c] sm:$0xf] %vm2684, %v2639
      %2705 = vst.msk [vmem:[%s298 + $0x50] sm:$0xf] %vm2684, %v2640
      %2706 = vst.msk [vmem:[%s298 + $0x54] sm:$0xf] %vm2684, %v2641
      %2707 = vst.msk [vmem:[%s298 + $0x58] sm:$0xf] %vm2684, %v2642
      %2708 = vst.msk [vmem:[%s298 + $0x5c] sm:$0xf] %vm2684, %v2643
      %2709 = vst.msk [vmem:[%s298 + $0x60] sm:$0xf] %vm2684, %v2644
      %2710 = vst.msk [vmem:[%s298 + $0x64] sm:$0xf] %vm2684, %v2645
      %2711 = vst.msk [vmem:[%s298 + $0x68] sm:$0xf] %vm2684, %v2646
      %2712 = vst.msk [vmem:[%s298 + $0x6c] sm:$0xf] %vm2684, %v2647
      %2713 = vst.msk [vmem:[%s298 + $0x70] sm:$0xf] %vm2684, %v2648
      %2714 = vst.msk [vmem:[%s298 + $0x74] sm:$0xf] %vm2684, %v2649
      %2715 = vst.msk [vmem:[%s298 + $0x78] sm:$0xf] %vm2684, %v2650
      %2716 = vst.msk [vmem:[%s298 + $0x7c] sm:$0xf] %vm2684, %v2651
      %s2717 = smul.u32 32, %s20
      %p2718 = scmp.lt.s32.totalorder %s19, 1
      %s2719 = scalar_select %p2718, %s19, 1
      %p2720 = scmp.lt.s32.totalorder %s2717, 31
      %s2721 = scalar_select %p2720, %s2717, 31
      %s2722 = smul.addr %s2719, 32
      %s2723 = sadd.s32 %s2721, %s2722
      %s2724 = smul.addr %s2723, 4
      %s2725 = scalar_lea.vmem %s4, %s2724
      // Predicated region
      $region37: #{tpu_custom_call.1} parent=35 // pred_check
        %p2726 = pneg %p153
      $region38: #{tpu_custom_call.1} parent=35 // pred_check_branch
        %2728 = sbr.rel (%p2726) target = $region40
      $region39: #{tpu_custom_call.1} parent=35 // pred_region
        %s2729 = smul.u32 32, %s20
      $region40: #{tpu_custom_call.1} parent=35 // pred_fallthru
        _
    $region36: #{tpu_custom_call.1} parent=5 // pred_fallthru
      _
    %p2730 = scmp.le.s32.totalorder 2, %s10
    // Predicated region
    $region41: #{tpu_custom_call.1} parent=5 // pred_check
      %p2731 = pneg %p2730
    $region42: #{tpu_custom_call.1} parent=5 // pred_check_branch
      %2733 = sbr.rel (%p2731) target = $region44
    $region43: #{tpu_custom_call.1} parent=5 // pred_region
      %s2734 = ssub.s32 %s10, 2
      // Predicated region
      $region45: #{tpu_custom_call.1} parent=43 // pred_check
        %p2735 = pneg %p159
      $region46: #{tpu_custom_call.1} parent=43 // pred_check_branch
        %2737 = sbr.rel (%p2735) target = $region48
      $region47: #{tpu_custom_call.1} parent=43 // pred_region
        %s2738 = smul.u32 32, %s22
        %p2739 = scmp.lt.s32.totalorder %s21, 1
        %s2740 = scalar_select %p2739, %s21, 1
        %p2741 = scmp.lt.s32.totalorder %s2738, 31
        %s2742 = scalar_select %p2741, %s2738, 31
        %s2743 = smul.addr %s2740, 32
        %s2744 = sadd.s32 %s2742, %s2743
        %s2745 = smul.addr %s2744, 4
        %s2746 = scalar_lea.vmem %s4, %s2745
      $region48: #{tpu_custom_call.1} parent=43 // pred_fallthru
        _
    $region44: #{tpu_custom_call.1} parent=5 // pred_fallthru
      _
  $region6: #{tpu_custom_call.1} parent=0 // loop_footer
    %s14 = sadd.s32 1, %s10
  $region7: #{tpu_custom_call.1} parent=0 // loop_footer_branch
    %9 = sbr.rel target = $region3
  $region8: #{tpu_custom_call.1} parent=0 // loop_exit
    _

</llo_original>
